<compile_context>
chip_gen: v5e
topology: v5e:2x2
jax: 0.10.0
libtpu: 0.0.40
codegen_flags: <defaults>
</compile_context>

<pallas_src>
import functools

import jax
import jax.numpy as jnp
from jax import lax
from jax.experimental import pallas as pl
from jax.experimental.pallas import tpu as pltpu


def _brits_kernel(T, Bp,
                  x_ref,      # (T*Bp, D)   f32   time-major, batch padded to 8
                  wih0_ref,   # (D, 4H)     f32   g-cols pre-scaled x2
                  whh0_ref,   # (H, 4H)     bf16  g-cols pre-scaled x2
                  b0_ref,     # (1, 4H)     f32   (b_ih_l0 + b_hh_l0), g-cols x2
                  w1cat_ref,  # (2H, 4H)    bf16  [w_ih_l1; w_hh_l1], g-cols x2
                  b1_ref,     # (1, 4H)     f32   (b_ih_l1 + b_hh_l1), g-cols x2
                  wr1_ref,    # (H, H//2)   f32
                  br1_ref,    # (1, H//2)   f32
                  wr2_ref,    # (H//2, D)   f32
                  br2_ref,    # (1, D)      f32
                  gsc_ref,    # (1, 4H)     f32   gate scale  (0.5 i/f/o, 1.0 g)
                  gof_ref,    # (1, 4H)     f32   gate offset (0.5 i/f/o, 0.0 g)
                  out_ref,    # (T*Bp, D)   f32
                  gx0_ref,    # (T*Bp, 4H)  f32   VMEM scratch
                  h1s_ref):   # (T*Bp, H)   f32   VMEM scratch
    H = whh0_ref.shape[0]

    # Hoist small / recurrent operands out of the unrolled loop (a few vregs):
    b1 = b1_ref[...]
    gsc = gsc_ref[...]
    gof = gof_ref[...]
    whh0 = whh0_ref[...]       # bf16, 2 vregs
    w1cat = w1cat_ref[...]     # bf16, 4 vregs

    # ---- hoisted layer-0 input projection: one (T*Bp, D) @ (D, 4H) matmul ----
    gx0_ref[...] = (jnp.dot(x_ref[...], wih0_ref[...],
                            preferred_element_type=jnp.float32) + b0_ref[...])

    def gates_to_hc(raw, c):
        # raw has its g-gate columns pre-scaled by 2, so one full-vreg tanh
        # gives tanh(0.5*x) for i/f/o (-> sigmoid via scale/offset) and
        # tanh(x) for g in a single EUP push.
        t = jnp.tanh(0.5 * raw)
        act = gsc * t + gof
        i = act[:, 0 * H:1 * H]
        f = act[:, 1 * H:2 * H]
        g = act[:, 2 * H:3 * H]
        o = act[:, 3 * H:4 * H]
        c_new = f * c + i * g
        h_new = o * jnp.tanh(c_new)
        return h_new, c_new

    def step(t, carry):
        h0, c0, h1, c1 = carry
        row = pl.multiple_of(t * Bp, 8)
        # layer 0: precomputed input part + recurrent part (bf16 operands, f32 acc)
        g0 = gx0_ref[pl.ds(row, Bp), :] + jnp.dot(
            h0.astype(jnp.bfloat16), whh0, preferred_element_type=jnp.float32)
        h0n, c0n = gates_to_hc(g0, c0)
        # layer 1: fused [h0n, h1] @ [wih1; whh1]  (one MXU push instead of two)
        # TODO(synk): nn.LSTM dropout=0.1 between layers applies only in training;
        #             eval-mode forward (identity between layers) is implemented.
        hcat = jnp.concatenate([h0n, h1], axis=1).astype(jnp.bfloat16)
        g1 = jnp.dot(hcat, w1cat, preferred_element_type=jnp.float32) + b1
        h1n, c1n = gates_to_hc(g1, c1)
        h1s_ref[pl.ds(row, Bp), :] = h1n
        return (h0n, c0n, h1n, c1n)

    zeros = jnp.zeros((Bp, H), jnp.float32)
    # T is static and small -> full unroll for cross-iteration scheduling.
    lax.fori_loop(0, T, step, (zeros, zeros, zeros, zeros), unroll=True)

    # ---- regression head batched over all T*Bp rows: Linear -> ReLU -> Linear ----
    hid = jnp.maximum(
        jnp.dot(h1s_ref[...], wr1_ref[...], preferred_element_type=jnp.float32)
        + br1_ref[...], 0.0)
    out_ref[...] = (jnp.dot(hid, wr2_ref[...], preferred_element_type=jnp.float32)
                    + br2_ref[...]).astype(out_ref.dtype)


def init_brits_params(key, input_dim, hidden_dim=64):
    """Deterministic PyTorch-style uniform(-1/sqrt(H), 1/sqrt(H)) init."""
    H = hidden_dim
    D = input_dim
    k = 1.0 / jnp.sqrt(jnp.float32(H))
    keys = jax.random.split(key, 12)

    def u(kk, shape):
        return jax.random.uniform(kk, shape, jnp.float32, -k, k)

    params = {
        # LSTM layer 0
        "w_ih_l0": u(keys[0], (4 * H, D)),
        "w_hh_l0": u(keys[1], (4 * H, H)),
        "b_ih_l0": u(keys[2], (4 * H,)),
        "b_hh_l0": u(keys[3], (4 * H,)),
        # LSTM layer 1
        "w_ih_l1": u(keys[4], (4 * H, H)),
        "w_hh_l1": u(keys[5], (4 * H, H)),
        "b_ih_l1": u(keys[6], (4 * H,)),
        "b_hh_l1": u(keys[7], (4 * H,)),
        # regression head
        "w_r1": u(keys[8], (H // 2, H)),
        "b_r1": u(keys[9], (H // 2,)),
        "w_r2": u(keys[10], (D, H // 2)),
        "b_r2": u(keys[11], (D,)),
    }
    return params


def brits_forward(params, x, mask, hidden_dim=64):
    """Matches BRITS.forward(x, mask). `mask` is unused by the reference forward."""
    del mask  # the reference PyTorch forward never reads the mask
    squeeze_seq = False
    if x.ndim == 2:
        x = x[:, None, :]
        squeeze_seq = True

    B, T, D = x.shape
    H = hidden_dim
    Bp = max(8, ((B + 7) // 8) * 8)          # pad batch to a sublane multiple

    x_tbd = jnp.transpose(x, (1, 0, 2)).astype(jnp.float32)        # (T, B, D)
    if Bp != B:
        x_tbd = jnp.pad(x_tbd, ((0, 0), (0, Bp - B), (0, 0)))
    x_flat = x_tbd.reshape(T * Bp, D)                              # (T*Bp, D)

    # --- gate-column rescaling so the kernel uses one full-vreg tanh per layer ---
    # PyTorch gate order: i, f, g, o.  Scale g-columns by 2 in the pre-activation.
    col_scale = jnp.concatenate([jnp.ones((2 * H,), jnp.float32),
                                 jnp.full((H,), 2.0, jnp.float32),
                                 jnp.ones((H,), jnp.float32)])
    gate_scale = jnp.concatenate([jnp.full((2 * H,), 0.5, jnp.float32),
                                  jnp.ones((H,), jnp.float32),
                                  jnp.full((H,), 0.5, jnp.float32)]).reshape(1, 4 * H)
    gate_offset = jnp.concatenate([jnp.full((2 * H,), 0.5, jnp.float32),
                                   jnp.zeros((H,), jnp.float32),
                                   jnp.full((H,), 0.5, jnp.float32)]).reshape(1, 4 * H)

    # pre-transpose weights / fold biases / fuse layer-1 weights for the kernel
    wih0 = (params["w_ih_l0"].T * col_scale[None, :]).astype(jnp.float32)    # (D, 4H)
    whh0 = (params["w_hh_l0"].T * col_scale[None, :]).astype(jnp.bfloat16)   # (H, 4H)
    b0 = ((params["b_ih_l0"] + params["b_hh_l0"]) * col_scale
          ).reshape(1, 4 * H).astype(jnp.float32)
    w1cat = (jnp.concatenate([params["w_ih_l1"].T, params["w_hh_l1"].T], axis=0)
             * col_scale[None, :]).astype(jnp.bfloat16)                      # (2H, 4H)
    b1 = ((params["b_ih_l1"] + params["b_hh_l1"]) * col_scale
          ).reshape(1, 4 * H).astype(jnp.float32)
    wr1 = params["w_r1"].T.astype(jnp.float32)                               # (H, H//2)
    br1 = params["b_r1"].reshape(1, H // 2).astype(jnp.float32)
    wr2 = params["w_r2"].T.astype(jnp.float32)                               # (H//2, D)
    br2 = params["b_r2"].reshape(1, D).astype(jnp.float32)

    vmem = pl.BlockSpec(memory_space=pltpu.MemorySpace.VMEM)
    out_flat = pl.pallas_call(
        functools.partial(_brits_kernel, T, Bp),
        out_shape=jax.ShapeDtypeStruct((T * Bp, D), jnp.float32),
        in_specs=[vmem] * 12,
        out_specs=vmem,
        scratch_shapes=[
            pltpu.VMEM((T * Bp, 4 * H), jnp.float32),   # hoisted input-projection gates
            pltpu.VMEM((T * Bp, H), jnp.float32),       # layer-1 hidden states
        ],
    )(x_flat, wih0, whh0, b0, w1cat, b1, wr1, br1, wr2, br2,
      gate_scale, gate_offset)

    out_tbd = out_flat.reshape(T, Bp, D)[:, :B, :]                 # (T, B, D)
    imputed = jnp.transpose(out_tbd, (1, 0, 2))                    # (B, T, D)
    if squeeze_seq:
        imputed = imputed[:, 0, :]
    return imputed


if __name__ == "__main__":
    # small, module-consistent shapes
    batch, seq, input_dim, hidden_dim = 4, 8, 8, 32

    key = jax.random.PRNGKey(0)
    k_par, k_x, k_m = jax.random.split(key, 3)

    params = init_brits_params(k_par, input_dim, hidden_dim)
    x = jax.random.normal(k_x, (batch, seq, input_dim), jnp.float32)
    mask = (jax.random.uniform(k_m, (batch, seq, input_dim)) > 0.3).astype(jnp.float32)

    out = brits_forward(params, x, mask, hidden_dim=hidden_dim)
    out = jax.block_until_ready(out)

    assert out.shape == (batch, seq, input_dim), out.shape
    assert jnp.all(jnp.isfinite(out))
    print("KERNEL_OK")
</pallas_src>

<mosaic_0001>
module attributes {stable_mosaic.version = 11 : i64} {
  func.func @_brits_kernel(%arg0: memref<64x8xf32, #tpu.memory_space<vmem>>, %arg1: memref<8x128xf32, #tpu.memory_space<vmem>>, %arg2: memref<32x128xbf16, #tpu.memory_space<vmem>>, %arg3: memref<1x128xf32, #tpu.memory_space<vmem>>, %arg4: memref<64x128xbf16, #tpu.memory_space<vmem>>, %arg5: memref<1x128xf32, #tpu.memory_space<vmem>>, %arg6: memref<32x16xf32, #tpu.memory_space<vmem>>, %arg7: memref<1x16xf32, #tpu.memory_space<vmem>>, %arg8: memref<16x8xf32, #tpu.memory_space<vmem>>, %arg9: memref<1x8xf32, #tpu.memory_space<vmem>>, %arg10: memref<1x128xf32, #tpu.memory_space<vmem>>, %arg11: memref<1x128xf32, #tpu.memory_space<vmem>>, %arg12: memref<64x8xf32, #tpu.memory_space<vmem>>, %arg13: memref<64x128xf32, #tpu.memory_space<vmem>>, %arg14: memref<64x32xf32, #tpu.memory_space<vmem>>) attributes {dimension_semantics = [], scalar_prefetch = 0 : i64, scratch_operands = 2 : i64, tpu.core_type = #tpu.core_type<tc>} {
    %c0 = arith.constant 0 : index
    %c0_0 = arith.constant 0 : index
    %0 = vector.load %arg5[%c0, %c0_0] : memref<1x128xf32, #tpu.memory_space<vmem>>, vector<1x128xf32>
    %c0_1 = arith.constant 0 : index
    %c0_2 = arith.constant 0 : index
    %1 = vector.load %arg10[%c0_1, %c0_2] : memref<1x128xf32, #tpu.memory_space<vmem>>, vector<1x128xf32>
    %c0_3 = arith.constant 0 : index
    %c0_4 = arith.constant 0 : index
    %2 = vector.load %arg11[%c0_3, %c0_4] : memref<1x128xf32, #tpu.memory_space<vmem>>, vector<1x128xf32>
    %c0_5 = arith.constant 0 : index
    %c0_6 = arith.constant 0 : index
    %3 = vector.load %arg2[%c0_5, %c0_6] : memref<32x128xbf16, #tpu.memory_space<vmem>>, vector<32x128xbf16>
    %c0_7 = arith.constant 0 : index
    %c0_8 = arith.constant 0 : index
    %4 = vector.load %arg4[%c0_7, %c0_8] : memref<64x128xbf16, #tpu.memory_space<vmem>>, vector<64x128xbf16>
    %c0_9 = arith.constant 0 : index
    %c0_10 = arith.constant 0 : index
    %5 = vector.load %arg0[%c0_9, %c0_10] : memref<64x8xf32, #tpu.memory_space<vmem>>, vector<64x8xf32>
    %c0_11 = arith.constant 0 : index
    %c0_12 = arith.constant 0 : index
    %6 = vector.load %arg1[%c0_11, %c0_12] : memref<8x128xf32, #tpu.memory_space<vmem>>, vector<8x128xf32>
    %cst = arith.constant dense<0.000000e+00> : vector<64x128xf32>
    %7 = tpu.matmul %5, %6, %cst {dimension_numbers = #tpu.dot_dimension_numbers<[1], [0], [0], [1], [0, 0, 1, 1], [], []>} : vector<64x8xf32>, vector<8x128xf32>, vector<64x128xf32> -> vector<64x128xf32>
    %c0_13 = arith.constant 0 : index
    %c0_14 = arith.constant 0 : index
    %8 = vector.load %arg3[%c0_13, %c0_14] : memref<1x128xf32, #tpu.memory_space<vmem>>, vector<1x128xf32>
    %9 = vector.broadcast %8 : vector<1x128xf32> to vector<64x128xf32>
    %10 = arith.addf %7, %9 : vector<64x128xf32>
    %c0_15 = arith.constant 0 : index
    %c0_16 = arith.constant 0 : index
    %11 = vector.load %arg13[%c0_15, %c0_16] : memref<64x128xf32, #tpu.memory_space<vmem>>, vector<64x128xf32>
    tpu.vector_store %arg13[%c0_15, %c0_16], %10 {strides = array<i32>} : memref<64x128xf32, #tpu.memory_space<vmem>>, vector<64x128xf32>,
    %cst_17 = arith.constant 0.000000e+00 : f32
    %12 = vector.broadcast %cst_17 : f32 to vector<8x32xf32>
    %c0_i32 = arith.constant 0 : i32
    %c8_i32 = arith.constant 8 : i32
    %13 = arith.muli %c0_i32, %c8_i32 : i32
    %14 = tpu.assume_multiple %13, 8 : i32
    %15 = arith.index_cast %14 : i32 to index
    %c0_18 = arith.constant 0 : index
    %16 = vector.load %arg13[%15, %c0_18] : memref<64x128xf32, #tpu.memory_space<vmem>>, vector<8x128xf32>
    %17 = arith.truncf %12 : vector<8x32xf32> to vector<8x32xbf16>
    %cst_19 = arith.constant dense<0.000000e+00> : vector<8x128xf32>
    %18 = tpu.matmul %17, %3, %cst_19 {dimension_numbers = #tpu.dot_dimension_numbers<[1], [0], [0], [1], [0, 0, 1, 1], [], []>} : vector<8x32xbf16>, vector<32x128xbf16>, vector<8x128xf32> -> vector<8x128xf32>
    %19 = arith.addf %16, %18 : vector<8x128xf32>
    %cst_20 = arith.constant 5.000000e-01 : f32
    %20 = vector.broadcast %cst_20 : f32 to vector<8x128xf32>
    %21 = arith.mulf %20, %19 : vector<8x128xf32>
    %22 = math.tanh %21 : vector<8x128xf32>
    %23 = vector.broadcast %1 : vector<1x128xf32> to vector<8x128xf32>
    %24 = arith.mulf %23, %22 : vector<8x128xf32>
    %25 = vector.broadcast %2 : vector<1x128xf32> to vector<8x128xf32>
    %26 = arith.addf %24, %25 : vector<8x128xf32>
    %27 = vector.extract_strided_slice %26 {offsets = [0, 0], sizes = [8, 32], strides = [1, 1]} : vector<8x128xf32> to vector<8x32xf32>
    %28 = vector.extract_strided_slice %26 {offsets = [0, 32], sizes = [8, 32], strides = [1, 1]} : vector<8x128xf32> to vector<8x32xf32>
    %29 = vector.extract_strided_slice %26 {offsets = [0, 64], sizes = [8, 32], strides = [1, 1]} : vector<8x128xf32> to vector<8x32xf32>
    %30 = vector.extract_strided_slice %26 {offsets = [0, 96], sizes = [8, 32], strides = [1, 1]} : vector<8x128xf32> to vector<8x32xf32>
    %31 = arith.mulf %28, %12 : vector<8x32xf32>
    %32 = arith.mulf %27, %29 : vector<8x32xf32>
    %33 = arith.addf %31, %32 : vector<8x32xf32>
    %34 = math.tanh %33 : vector<8x32xf32>
    %35 = arith.mulf %30, %34 : vector<8x32xf32>
    %36 = tpu.concatenate %35, %12 in 1 : vector<8x32xf32>, vector<8x32xf32> -> vector<8x64xf32>
    %37 = arith.truncf %36 : vector<8x64xf32> to vector<8x64xbf16>
    %cst_21 = arith.constant dense<0.000000e+00> : vector<8x128xf32>
    %38 = tpu.matmul %37, %4, %cst_21 {dimension_numbers = #tpu.dot_dimension_numbers<[1], [0], [0], [1], [0, 0, 1, 1], [], []>} : vector<8x64xbf16>, vector<64x128xbf16>, vector<8x128xf32> -> vector<8x128xf32>
    %39 = vector.broadcast %0 : vector<1x128xf32> to vector<8x128xf32>
    %40 = arith.addf %38, %39 : vector<8x128xf32>
    %cst_22 = arith.constant 5.000000e-01 : f32
    %41 = vector.broadcast %cst_22 : f32 to vector<8x128xf32>
    %42 = arith.mulf %41, %40 : vector<8x128xf32>
    %43 = math.tanh %42 : vector<8x128xf32>
    %44 = vector.broadcast %1 : vector<1x128xf32> to vector<8x128xf32>
    %45 = arith.mulf %44, %43 : vector<8x128xf32>
    %46 = vector.broadcast %2 : vector<1x128xf32> to vector<8x128xf32>
    %47 = arith.addf %45, %46 : vector<8x128xf32>
    %48 = vector.extract_strided_slice %47 {offsets = [0, 0], sizes = [8, 32], strides = [1, 1]} : vector<8x128xf32> to vector<8x32xf32>
    %49 = vector.extract_strided_slice %47 {offsets = [0, 32], sizes = [8, 32], strides = [1, 1]} : vector<8x128xf32> to vector<8x32xf32>
    %50 = vector.extract_strided_slice %47 {offsets = [0, 64], sizes = [8, 32], strides = [1, 1]} : vector<8x128xf32> to vector<8x32xf32>
    %51 = vector.extract_strided_slice %47 {offsets = [0, 96], sizes = [8, 32], strides = [1, 1]} : vector<8x128xf32> to vector<8x32xf32>
    %52 = arith.mulf %49, %12 : vector<8x32xf32>
    %53 = arith.mulf %48, %50 : vector<8x32xf32>
    %54 = arith.addf %52, %53 : vector<8x32xf32>
    %55 = math.tanh %54 : vector<8x32xf32>
    %56 = arith.mulf %51, %55 : vector<8x32xf32>
    %57 = arith.index_cast %14 : i32 to index
    %c0_23 = arith.constant 0 : index
    %58 = vector.load %arg14[%57, %c0_23] : memref<64x32xf32, #tpu.memory_space<vmem>>, vector<8x32xf32>
    tpu.vector_store %arg14[%57, %c0_23], %56 {strides = array<i32>} : memref<64x32xf32, #tpu.memory_space<vmem>>, vector<8x32xf32>,
    %c1_i32 = arith.constant 1 : i32
    %c8_i32_24 = arith.constant 8 : i32
    %59 = arith.muli %c1_i32, %c8_i32_24 : i32
    %60 = tpu.assume_multiple %59, 8 : i32
    %61 = arith.index_cast %60 : i32 to index
    %c0_25 = arith.constant 0 : index
    %62 = vector.load %arg13[%61, %c0_25] : memref<64x128xf32, #tpu.memory_space<vmem>>, vector<8x128xf32>
    %63 = arith.truncf %35 : vector<8x32xf32> to vector<8x32xbf16>
    %cst_26 = arith.constant dense<0.000000e+00> : vector<8x128xf32>
    %64 = tpu.matmul %63, %3, %cst_26 {dimension_numbers = #tpu.dot_dimension_numbers<[1], [0], [0], [1], [0, 0, 1, 1], [], []>} : vector<8x32xbf16>, vector<32x128xbf16>, vector<8x128xf32> -> vector<8x128xf32>
    %65 = arith.addf %62, %64 : vector<8x128xf32>
    %cst_27 = arith.constant 5.000000e-01 : f32
    %66 = vector.broadcast %cst_27 : f32 to vector<8x128xf32>
    %67 = arith.mulf %66, %65 : vector<8x128xf32>
    %68 = math.tanh %67 : vector<8x128xf32>
    %69 = vector.broadcast %1 : vector<1x128xf32> to vector<8x128xf32>
    %70 = arith.mulf %69, %68 : vector<8x128xf32>
    %71 = vector.broadcast %2 : vector<1x128xf32> to vector<8x128xf32>
    %72 = arith.addf %70, %71 : vector<8x128xf32>
    %73 = vector.extract_strided_slice %72 {offsets = [0, 0], sizes = [8, 32], strides = [1, 1]} : vector<8x128xf32> to vector<8x32xf32>
    %74 = vector.extract_strided_slice %72 {offsets = [0, 32], sizes = [8, 32], strides = [1, 1]} : vector<8x128xf32> to vector<8x32xf32>
    %75 = vector.extract_strided_slice %72 {offsets = [0, 64], sizes = [8, 32], strides = [1, 1]} : vector<8x128xf32> to vector<8x32xf32>
    %76 = vector.extract_strided_slice %72 {offsets = [0, 96], sizes = [8, 32], strides = [1, 1]} : vector<8x128xf32> to vector<8x32xf32>
    %77 = arith.mulf %74, %33 : vector<8x32xf32>
    %78 = arith.mulf %73, %75 : vector<8x32xf32>
    %79 = arith.addf %77, %78 : vector<8x32xf32>
    %80 = math.tanh %79 : vector<8x32xf32>
    %81 = arith.mulf %76, %80 : vector<8x32xf32>
    %82 = tpu.concatenate %81, %56 in 1 : vector<8x32xf32>, vector<8x32xf32> -> vector<8x64xf32>
    %83 = arith.truncf %82 : vector<8x64xf32> to vector<8x64xbf16>
    %cst_28 = arith.constant dense<0.000000e+00> : vector<8x128xf32>
    %84 = tpu.matmul %83, %4, %cst_28 {dimension_numbers = #tpu.dot_dimension_numbers<[1], [0], [0], [1], [0, 0, 1, 1], [], []>} : vector<8x64xbf16>, vector<64x128xbf16>, vector<8x128xf32> -> vector<8x128xf32>
    %85 = vector.broadcast %0 : vector<1x128xf32> to vector<8x128xf32>
    %86 = arith.addf %84, %85 : vector<8x128xf32>
    %cst_29 = arith.constant 5.000000e-01 : f32
    %87 = vector.broadcast %cst_29 : f32 to vector<8x128xf32>
    %88 = arith.mulf %87, %86 : vector<8x128xf32>
    %89 = math.tanh %88 : vector<8x128xf32>
    %90 = vector.broadcast %1 : vector<1x128xf32> to vector<8x128xf32>
    %91 = arith.mulf %90, %89 : vector<8x128xf32>
    %92 = vector.broadcast %2 : vector<1x128xf32> to vector<8x128xf32>
    %93 = arith.addf %91, %92 : vector<8x128xf32>
    %94 = vector.extract_strided_slice %93 {offsets = [0, 0], sizes = [8, 32], strides = [1, 1]} : vector<8x128xf32> to vector<8x32xf32>
    %95 = vector.extract_strided_slice %93 {offsets = [0, 32], sizes = [8, 32], strides = [1, 1]} : vector<8x128xf32> to vector<8x32xf32>
    %96 = vector.extract_strided_slice %93 {offsets = [0, 64], sizes = [8, 32], strides = [1, 1]} : vector<8x128xf32> to vector<8x32xf32>
    %97 = vector.extract_strided_slice %93 {offsets = [0, 96], sizes = [8, 32], strides = [1, 1]} : vector<8x128xf32> to vector<8x32xf32>
    %98 = arith.mulf %95, %54 : vector<8x32xf32>
    %99 = arith.mulf %94, %96 : vector<8x32xf32>
    %100 = arith.addf %98, %99 : vector<8x32xf32>
    %101 = math.tanh %100 : vector<8x32xf32>
    %102 = arith.mulf %97, %101 : vector<8x32xf32>
    %103 = arith.index_cast %60 : i32 to index
    %c0_30 = arith.constant 0 : index
    %104 = vector.load %arg14[%103, %c0_30] : memref<64x32xf32, #tpu.memory_space<vmem>>, vector<8x32xf32>
    tpu.vector_store %arg14[%103, %c0_30], %102 {strides = array<i32>} : memref<64x32xf32, #tpu.memory_space<vmem>>, vector<8x32xf32>,
    %c2_i32 = arith.constant 2 : i32
    %c8_i32_31 = arith.constant 8 : i32
    %105 = arith.muli %c2_i32, %c8_i32_31 : i32
    %106 = tpu.assume_multiple %105, 8 : i32
    %107 = arith.index_cast %106 : i32 to index
    %c0_32 = arith.constant 0 : index
    %108 = vector.load %arg13[%107, %c0_32] : memref<64x128xf32, #tpu.memory_space<vmem>>, vector<8x128xf32>
    %109 = arith.truncf %81 : vector<8x32xf32> to vector<8x32xbf16>
    %cst_33 = arith.constant dense<0.000000e+00> : vector<8x128xf32>
    %110 = tpu.matmul %109, %3, %cst_33 {dimension_numbers = #tpu.dot_dimension_numbers<[1], [0], [0], [1], [0, 0, 1, 1], [], []>} : vector<8x32xbf16>, vector<32x128xbf16>, vector<8x128xf32> -> vector<8x128xf32>
    %111 = arith.addf %108, %110 : vector<8x128xf32>
    %cst_34 = arith.constant 5.000000e-01 : f32
    %112 = vector.broadcast %cst_34 : f32 to vector<8x128xf32>
    %113 = arith.mulf %112, %111 : vector<8x128xf32>
    %114 = math.tanh %113 : vector<8x128xf32>
    %115 = vector.broadcast %1 : vector<1x128xf32> to vector<8x128xf32>
    %116 = arith.mulf %115, %114 : vector<8x128xf32>
    %117 = vector.broadcast %2 : vector<1x128xf32> to vector<8x128xf32>
    %118 = arith.addf %116, %117 : vector<8x128xf32>
    %119 = vector.extract_strided_slice %118 {offsets = [0, 0], sizes = [8, 32], strides = [1, 1]} : vector<8x128xf32> to vector<8x32xf32>
    %120 = vector.extract_strided_slice %118 {offsets = [0, 32], sizes = [8, 32], strides = [1, 1]} : vector<8x128xf32> to vector<8x32xf32>
    %121 = vector.extract_strided_slice %118 {offsets = [0, 64], sizes = [8, 32], strides = [1, 1]} : vector<8x128xf32> to vector<8x32xf32>
    %122 = vector.extract_strided_slice %118 {offsets = [0, 96], sizes = [8, 32], strides = [1, 1]} : vector<8x128xf32> to vector<8x32xf32>
    %123 = arith.mulf %120, %79 : vector<8x32xf32>
    %124 = arith.mulf %119, %121 : vector<8x32xf32>
    %125 = arith.addf %123, %124 : vector<8x32xf32>
    %126 = math.tanh %125 : vector<8x32xf32>
    %127 = arith.mulf %122, %126 : vector<8x32xf32>
    %128 = tpu.concatenate %127, %102 in 1 : vector<8x32xf32>, vector<8x32xf32> -> vector<8x64xf32>
    %129 = arith.truncf %128 : vector<8x64xf32> to vector<8x64xbf16>
    %cst_35 = arith.constant dense<0.000000e+00> : vector<8x128xf32>
    %130 = tpu.matmul %129, %4, %cst_35 {dimension_numbers = #tpu.dot_dimension_numbers<[1], [0], [0], [1], [0, 0, 1, 1], [], []>} : vector<8x64xbf16>, vector<64x128xbf16>, vector<8x128xf32> -> vector<8x128xf32>
    %131 = vector.broadcast %0 : vector<1x128xf32> to vector<8x128xf32>
    %132 = arith.addf %130, %131 : vector<8x128xf32>
    %cst_36 = arith.constant 5.000000e-01 : f32
    %133 = vector.broadcast %cst_36 : f32 to vector<8x128xf32>
    %134 = arith.mulf %133, %132 : vector<8x128xf32>
    %135 = math.tanh %134 : vector<8x128xf32>
    %136 = vector.broadcast %1 : vector<1x128xf32> to vector<8x128xf32>
    %137 = arith.mulf %136, %135 : vector<8x128xf32>
    %138 = vector.broadcast %2 : vector<1x128xf32> to vector<8x128xf32>
    %139 = arith.addf %137, %138 : vector<8x128xf32>
    %140 = vector.extract_strided_slice %139 {offsets = [0, 0], sizes = [8, 32], strides = [1, 1]} : vector<8x128xf32> to vector<8x32xf32>
    %141 = vector.extract_strided_slice %139 {offsets = [0, 32], sizes = [8, 32], strides = [1, 1]} : vector<8x128xf32> to vector<8x32xf32>
    %142 = vector.extract_strided_slice %139 {offsets = [0, 64], sizes = [8, 32], strides = [1, 1]} : vector<8x128xf32> to vector<8x32xf32>
    %143 = vector.extract_strided_slice %139 {offsets = [0, 96], sizes = [8, 32], strides = [1, 1]} : vector<8x128xf32> to vector<8x32xf32>
    %144 = arith.mulf %141, %100 : vector<8x32xf32>
    %145 = arith.mulf %140, %142 : vector<8x32xf32>
    %146 = arith.addf %144, %145 : vector<8x32xf32>
    %147 = math.tanh %146 : vector<8x32xf32>
    %148 = arith.mulf %143, %147 : vector<8x32xf32>
    %149 = arith.index_cast %106 : i32 to index
    %c0_37 = arith.constant 0 : index
    %150 = vector.load %arg14[%149, %c0_37] : memref<64x32xf32, #tpu.memory_space<vmem>>, vector<8x32xf32>
    tpu.vector_store %arg14[%149, %c0_37], %148 {strides = array<i32>} : memref<64x32xf32, #tpu.memory_space<vmem>>, vector<8x32xf32>,
    %c3_i32 = arith.constant 3 : i32
    %c8_i32_38 = arith.constant 8 : i32
    %151 = arith.muli %c3_i32, %c8_i32_38 : i32
    %152 = tpu.assume_multiple %151, 8 : i32
    %153 = arith.index_cast %152 : i32 to index
    %c0_39 = arith.constant 0 : index
    %154 = vector.load %arg13[%153, %c0_39] : memref<64x128xf32, #tpu.memory_space<vmem>>, vector<8x128xf32>
    %155 = arith.truncf %127 : vector<8x32xf32> to vector<8x32xbf16>
    %cst_40 = arith.constant dense<0.000000e+00> : vector<8x128xf32>
    %156 = tpu.matmul %155, %3, %cst_40 {dimension_numbers = #tpu.dot_dimension_numbers<[1], [0], [0], [1], [0, 0, 1, 1], [], []>} : vector<8x32xbf16>, vector<32x128xbf16>, vector<8x128xf32> -> vector<8x128xf32>
    %157 = arith.addf %154, %156 : vector<8x128xf32>
    %cst_41 = arith.constant 5.000000e-01 : f32
    %158 = vector.broadcast %cst_41 : f32 to vector<8x128xf32>
    %159 = arith.mulf %158, %157 : vector<8x128xf32>
    %160 = math.tanh %159 : vector<8x128xf32>
    %161 = vector.broadcast %1 : vector<1x128xf32> to vector<8x128xf32>
    %162 = arith.mulf %161, %160 : vector<8x128xf32>
    %163 = vector.broadcast %2 : vector<1x128xf32> to vector<8x128xf32>
    %164 = arith.addf %162, %163 : vector<8x128xf32>
    %165 = vector.extract_strided_slice %164 {offsets = [0, 0], sizes = [8, 32], strides = [1, 1]} : vector<8x128xf32> to vector<8x32xf32>
    %166 = vector.extract_strided_slice %164 {offsets = [0, 32], sizes = [8, 32], strides = [1, 1]} : vector<8x128xf32> to vector<8x32xf32>
    %167 = vector.extract_strided_slice %164 {offsets = [0, 64], sizes = [8, 32], strides = [1, 1]} : vector<8x128xf32> to vector<8x32xf32>
    %168 = vector.extract_strided_slice %164 {offsets = [0, 96], sizes = [8, 32], strides = [1, 1]} : vector<8x128xf32> to vector<8x32xf32>
    %169 = arith.mulf %166, %125 : vector<8x32xf32>
    %170 = arith.mulf %165, %167 : vector<8x32xf32>
    %171 = arith.addf %169, %170 : vector<8x32xf32>
    %172 = math.tanh %171 : vector<8x32xf32>
    %173 = arith.mulf %168, %172 : vector<8x32xf32>
    %174 = tpu.concatenate %173, %148 in 1 : vector<8x32xf32>, vector<8x32xf32> -> vector<8x64xf32>
    %175 = arith.truncf %174 : vector<8x64xf32> to vector<8x64xbf16>
    %cst_42 = arith.constant dense<0.000000e+00> : vector<8x128xf32>
    %176 = tpu.matmul %175, %4, %cst_42 {dimension_numbers = #tpu.dot_dimension_numbers<[1], [0], [0], [1], [0, 0, 1, 1], [], []>} : vector<8x64xbf16>, vector<64x128xbf16>, vector<8x128xf32> -> vector<8x128xf32>
    %177 = vector.broadcast %0 : vector<1x128xf32> to vector<8x128xf32>
    %178 = arith.addf %176, %177 : vector<8x128xf32>
    %cst_43 = arith.constant 5.000000e-01 : f32
    %179 = vector.broadcast %cst_43 : f32 to vector<8x128xf32>
    %180 = arith.mulf %179, %178 : vector<8x128xf32>
    %181 = math.tanh %180 : vector<8x128xf32>
    %182 = vector.broadcast %1 : vector<1x128xf32> to vector<8x128xf32>
    %183 = arith.mulf %182, %181 : vector<8x128xf32>
    %184 = vector.broadcast %2 : vector<1x128xf32> to vector<8x128xf32>
    %185 = arith.addf %183, %184 : vector<8x128xf32>
    %186 = vector.extract_strided_slice %185 {offsets = [0, 0], sizes = [8, 32], strides = [1, 1]} : vector<8x128xf32> to vector<8x32xf32>
    %187 = vector.extract_strided_slice %185 {offsets = [0, 32], sizes = [8, 32], strides = [1, 1]} : vector<8x128xf32> to vector<8x32xf32>
    %188 = vector.extract_strided_slice %185 {offsets = [0, 64], sizes = [8, 32], strides = [1, 1]} : vector<8x128xf32> to vector<8x32xf32>
    %189 = vector.extract_strided_slice %185 {offsets = [0, 96], sizes = [8, 32], strides = [1, 1]} : vector<8x128xf32> to vector<8x32xf32>
    %190 = arith.mulf %187, %146 : vector<8x32xf32>
    %191 = arith.mulf %186, %188 : vector<8x32xf32>
    %192 = arith.addf %190, %191 : vector<8x32xf32>
    %193 = math.tanh %192 : vector<8x32xf32>
    %194 = arith.mulf %189, %193 : vector<8x32xf32>
    %195 = arith.index_cast %152 : i32 to index
    %c0_44 = arith.constant 0 : index
    %196 = vector.load %arg14[%195, %c0_44] : memref<64x32xf32, #tpu.memory_space<vmem>>, vector<8x32xf32>
    tpu.vector_store %arg14[%195, %c0_44], %194 {strides = array<i32>} : memref<64x32xf32, #tpu.memory_space<vmem>>, vector<8x32xf32>,
    %c4_i32 = arith.constant 4 : i32
    %c8_i32_45 = arith.constant 8 : i32
    %197 = arith.muli %c4_i32, %c8_i32_45 : i32
    %198 = tpu.assume_multiple %197, 8 : i32
    %199 = arith.index_cast %198 : i32 to index
    %c0_46 = arith.constant 0 : index
    %200 = vector.load %arg13[%199, %c0_46] : memref<64x128xf32, #tpu.memory_space<vmem>>, vector<8x128xf32>
    %201 = arith.truncf %173 : vector<8x32xf32> to vector<8x32xbf16>
    %cst_47 = arith.constant dense<0.000000e+00> : vector<8x128xf32>
    %202 = tpu.matmul %201, %3, %cst_47 {dimension_numbers = #tpu.dot_dimension_numbers<[1], [0], [0], [1], [0, 0, 1, 1], [], []>} : vector<8x32xbf16>, vector<32x128xbf16>, vector<8x128xf32> -> vector<8x128xf32>
    %203 = arith.addf %200, %202 : vector<8x128xf32>
    %cst_48 = arith.constant 5.000000e-01 : f32
    %204 = vector.broadcast %cst_48 : f32 to vector<8x128xf32>
    %205 = arith.mulf %204, %203 : vector<8x128xf32>
    %206 = math.tanh %205 : vector<8x128xf32>
    %207 = vector.broadcast %1 : vector<1x128xf32> to vector<8x128xf32>
    %208 = arith.mulf %207, %206 : vector<8x128xf32>
    %209 = vector.broadcast %2 : vector<1x128xf32> to vector<8x128xf32>
    %210 = arith.addf %208, %209 : vector<8x128xf32>
    %211 = vector.extract_strided_slice %210 {offsets = [0, 0], sizes = [8, 32], strides = [1, 1]} : vector<8x128xf32> to vector<8x32xf32>
    %212 = vector.extract_strided_slice %210 {offsets = [0, 32], sizes = [8, 32], strides = [1, 1]} : vector<8x128xf32> to vector<8x32xf32>
    %213 = vector.extract_strided_slice %210 {offsets = [0, 64], sizes = [8, 32], strides = [1, 1]} : vector<8x128xf32> to vector<8x32xf32>
    %214 = vector.extract_strided_slice %210 {offsets = [0, 96], sizes = [8, 32], strides = [1, 1]} : vector<8x128xf32> to vector<8x32xf32>
    %215 = arith.mulf %212, %171 : vector<8x32xf32>
    %216 = arith.mulf %211, %213 : vector<8x32xf32>
    %217 = arith.addf %215, %216 : vector<8x32xf32>
    %218 = math.tanh %217 : vector<8x32xf32>
    %219 = arith.mulf %214, %218 : vector<8x32xf32>
    %220 = tpu.concatenate %219, %194 in 1 : vector<8x32xf32>, vector<8x32xf32> -> vector<8x64xf32>
    %221 = arith.truncf %220 : vector<8x64xf32> to vector<8x64xbf16>
    %cst_49 = arith.constant dense<0.000000e+00> : vector<8x128xf32>
    %222 = tpu.matmul %221, %4, %cst_49 {dimension_numbers = #tpu.dot_dimension_numbers<[1], [0], [0], [1], [0, 0, 1, 1], [], []>} : vector<8x64xbf16>, vector<64x128xbf16>, vector<8x128xf32> -> vector<8x128xf32>
    %223 = vector.broadcast %0 : vector<1x128xf32> to vector<8x128xf32>
    %224 = arith.addf %222, %223 : vector<8x128xf32>
    %cst_50 = arith.constant 5.000000e-01 : f32
    %225 = vector.broadcast %cst_50 : f32 to vector<8x128xf32>
    %226 = arith.mulf %225, %224 : vector<8x128xf32>
    %227 = math.tanh %226 : vector<8x128xf32>
    %228 = vector.broadcast %1 : vector<1x128xf32> to vector<8x128xf32>
    %229 = arith.mulf %228, %227 : vector<8x128xf32>
    %230 = vector.broadcast %2 : vector<1x128xf32> to vector<8x128xf32>
    %231 = arith.addf %229, %230 : vector<8x128xf32>
    %232 = vector.extract_strided_slice %231 {offsets = [0, 0], sizes = [8, 32], strides = [1, 1]} : vector<8x128xf32> to vector<8x32xf32>
    %233 = vector.extract_strided_slice %231 {offsets = [0, 32], sizes = [8, 32], strides = [1, 1]} : vector<8x128xf32> to vector<8x32xf32>
    %234 = vector.extract_strided_slice %231 {offsets = [0, 64], sizes = [8, 32], strides = [1, 1]} : vector<8x128xf32> to vector<8x32xf32>
    %235 = vector.extract_strided_slice %231 {offsets = [0, 96], sizes = [8, 32], strides = [1, 1]} : vector<8x128xf32> to vector<8x32xf32>
    %236 = arith.mulf %233, %192 : vector<8x32xf32>
    %237 = arith.mulf %232, %234 : vector<8x32xf32>
    %238 = arith.addf %236, %237 : vector<8x32xf32>
    %239 = math.tanh %238 : vector<8x32xf32>
    %240 = arith.mulf %235, %239 : vector<8x32xf32>
    %241 = arith.index_cast %198 : i32 to index
    %c0_51 = arith.constant 0 : index
    %242 = vector.load %arg14[%241, %c0_51] : memref<64x32xf32, #tpu.memory_space<vmem>>, vector<8x32xf32>
    tpu.vector_store %arg14[%241, %c0_51], %240 {strides = array<i32>} : memref<64x32xf32, #tpu.memory_space<vmem>>, vector<8x32xf32>,
    %c5_i32 = arith.constant 5 : i32
    %c8_i32_52 = arith.constant 8 : i32
    %243 = arith.muli %c5_i32, %c8_i32_52 : i32
    %244 = tpu.assume_multiple %243, 8 : i32
    %245 = arith.index_cast %244 : i32 to index
    %c0_53 = arith.constant 0 : index
    %246 = vector.load %arg13[%245, %c0_53] : memref<64x128xf32, #tpu.memory_space<vmem>>, vector<8x128xf32>
    %247 = arith.truncf %219 : vector<8x32xf32> to vector<8x32xbf16>
    %cst_54 = arith.constant dense<0.000000e+00> : vector<8x128xf32>
    %248 = tpu.matmul %247, %3, %cst_54 {dimension_numbers = #tpu.dot_dimension_numbers<[1], [0], [0], [1], [0, 0, 1, 1], [], []>} : vector<8x32xbf16>, vector<32x128xbf16>, vector<8x128xf32> -> vector<8x128xf32>
    %249 = arith.addf %246, %248 : vector<8x128xf32>
    %cst_55 = arith.constant 5.000000e-01 : f32
    %250 = vector.broadcast %cst_55 : f32 to vector<8x128xf32>
    %251 = arith.mulf %250, %249 : vector<8x128xf32>
    %252 = math.tanh %251 : vector<8x128xf32>
    %253 = vector.broadcast %1 : vector<1x128xf32> to vector<8x128xf32>
    %254 = arith.mulf %253, %252 : vector<8x128xf32>
    %255 = vector.broadcast %2 : vector<1x128xf32> to vector<8x128xf32>
    %256 = arith.addf %254, %255 : vector<8x128xf32>
    %257 = vector.extract_strided_slice %256 {offsets = [0, 0], sizes = [8, 32], strides = [1, 1]} : vector<8x128xf32> to vector<8x32xf32>
    %258 = vector.extract_strided_slice %256 {offsets = [0, 32], sizes = [8, 32], strides = [1, 1]} : vector<8x128xf32> to vector<8x32xf32>
    %259 = vector.extract_strided_slice %256 {offsets = [0, 64], sizes = [8, 32], strides = [1, 1]} : vector<8x128xf32> to vector<8x32xf32>
    %260 = vector.extract_strided_slice %256 {offsets = [0, 96], sizes = [8, 32], strides = [1, 1]} : vector<8x128xf32> to vector<8x32xf32>
    %261 = arith.mulf %258, %217 : vector<8x32xf32>
    %262 = arith.mulf %257, %259 : vector<8x32xf32>
    %263 = arith.addf %261, %262 : vector<8x32xf32>
    %264 = math.tanh %263 : vector<8x32xf32>
    %265 = arith.mulf %260, %264 : vector<8x32xf32>
    %266 = tpu.concatenate %265, %240 in 1 : vector<8x32xf32>, vector<8x32xf32> -> vector<8x64xf32>
    %267 = arith.truncf %266 : vector<8x64xf32> to vector<8x64xbf16>
    %cst_56 = arith.constant dense<0.000000e+00> : vector<8x128xf32>
    %268 = tpu.matmul %267, %4, %cst_56 {dimension_numbers = #tpu.dot_dimension_numbers<[1], [0], [0], [1], [0, 0, 1, 1], [], []>} : vector<8x64xbf16>, vector<64x128xbf16>, vector<8x128xf32> -> vector<8x128xf32>
    %269 = vector.broadcast %0 : vector<1x128xf32> to vector<8x128xf32>
    %270 = arith.addf %268, %269 : vector<8x128xf32>
    %cst_57 = arith.constant 5.000000e-01 : f32
    %271 = vector.broadcast %cst_57 : f32 to vector<8x128xf32>
    %272 = arith.mulf %271, %270 : vector<8x128xf32>
    %273 = math.tanh %272 : vector<8x128xf32>
    %274 = vector.broadcast %1 : vector<1x128xf32> to vector<8x128xf32>
    %275 = arith.mulf %274, %273 : vector<8x128xf32>
    %276 = vector.broadcast %2 : vector<1x128xf32> to vector<8x128xf32>
    %277 = arith.addf %275, %276 : vector<8x128xf32>
    %278 = vector.extract_strided_slice %277 {offsets = [0, 0], sizes = [8, 32], strides = [1, 1]} : vector<8x128xf32> to vector<8x32xf32>
    %279 = vector.extract_strided_slice %277 {offsets = [0, 32], sizes = [8, 32], strides = [1, 1]} : vector<8x128xf32> to vector<8x32xf32>
    %280 = vector.extract_strided_slice %277 {offsets = [0, 64], sizes = [8, 32], strides = [1, 1]} : vector<8x128xf32> to vector<8x32xf32>
    %281 = vector.extract_strided_slice %277 {offsets = [0, 96], sizes = [8, 32], strides = [1, 1]} : vector<8x128xf32> to vector<8x32xf32>
    %282 = arith.mulf %279, %238 : vector<8x32xf32>
    %283 = arith.mulf %278, %280 : vector<8x32xf32>
    %284 = arith.addf %282, %283 : vector<8x32xf32>
    %285 = math.tanh %284 : vector<8x32xf32>
    %286 = arith.mulf %281, %285 : vector<8x32xf32>
    %287 = arith.index_cast %244 : i32 to index
    %c0_58 = arith.constant 0 : index
    %288 = vector.load %arg14[%287, %c0_58] : memref<64x32xf32, #tpu.memory_space<vmem>>, vector<8x32xf32>
    tpu.vector_store %arg14[%287, %c0_58], %286 {strides = array<i32>} : memref<64x32xf32, #tpu.memory_space<vmem>>, vector<8x32xf32>,
    %c6_i32 = arith.constant 6 : i32
    %c8_i32_59 = arith.constant 8 : i32
    %289 = arith.muli %c6_i32, %c8_i32_59 : i32
    %290 = tpu.assume_multiple %289, 8 : i32
    %291 = arith.index_cast %290 : i32 to index
    %c0_60 = arith.constant 0 : index
    %292 = vector.load %arg13[%291, %c0_60] : memref<64x128xf32, #tpu.memory_space<vmem>>, vector<8x128xf32>
    %293 = arith.truncf %265 : vector<8x32xf32> to vector<8x32xbf16>
    %cst_61 = arith.constant dense<0.000000e+00> : vector<8x128xf32>
    %294 = tpu.matmul %293, %3, %cst_61 {dimension_numbers = #tpu.dot_dimension_numbers<[1], [0], [0], [1], [0, 0, 1, 1], [], []>} : vector<8x32xbf16>, vector<32x128xbf16>, vector<8x128xf32> -> vector<8x128xf32>
    %295 = arith.addf %292, %294 : vector<8x128xf32>
    %cst_62 = arith.constant 5.000000e-01 : f32
    %296 = vector.broadcast %cst_62 : f32 to vector<8x128xf32>
    %297 = arith.mulf %296, %295 : vector<8x128xf32>
    %298 = math.tanh %297 : vector<8x128xf32>
    %299 = vector.broadcast %1 : vector<1x128xf32> to vector<8x128xf32>
    %300 = arith.mulf %299, %298 : vector<8x128xf32>
    %301 = vector.broadcast %2 : vector<1x128xf32> to vector<8x128xf32>
    %302 = arith.addf %300, %301 : vector<8x128xf32>
    %303 = vector.extract_strided_slice %302 {offsets = [0, 0], sizes = [8, 32], strides = [1, 1]} : vector<8x128xf32> to vector<8x32xf32>
    %304 = vector.extract_strided_slice %302 {offsets = [0, 32], sizes = [8, 32], strides = [1, 1]} : vector<8x128xf32> to vector<8x32xf32>
    %305 = vector.extract_strided_slice %302 {offsets = [0, 64], sizes = [8, 32], strides = [1, 1]} : vector<8x128xf32> to vector<8x32xf32>
    %306 = vector.extract_strided_slice %302 {offsets = [0, 96], sizes = [8, 32], strides = [1, 1]} : vector<8x128xf32> to vector<8x32xf32>
    %307 = arith.mulf %304, %263 : vector<8x32xf32>
    %308 = arith.mulf %303, %305 : vector<8x32xf32>
    %309 = arith.addf %307, %308 : vector<8x32xf32>
    %310 = math.tanh %309 : vector<8x32xf32>
    %311 = arith.mulf %306, %310 : vector<8x32xf32>
    %312 = tpu.concatenate %311, %286 in 1 : vector<8x32xf32>, vector<8x32xf32> -> vector<8x64xf32>
    %313 = arith.truncf %312 : vector<8x64xf32> to vector<8x64xbf16>
    %cst_63 = arith.constant dense<0.000000e+00> : vector<8x128xf32>
    %314 = tpu.matmul %313, %4, %cst_63 {dimension_numbers = #tpu.dot_dimension_numbers<[1], [0], [0], [1], [0, 0, 1, 1], [], []>} : vector<8x64xbf16>, vector<64x128xbf16>, vector<8x128xf32> -> vector<8x128xf32>
    %315 = vector.broadcast %0 : vector<1x128xf32> to vector<8x128xf32>
    %316 = arith.addf %314, %315 : vector<8x128xf32>
    %cst_64 = arith.constant 5.000000e-01 : f32
    %317 = vector.broadcast %cst_64 : f32 to vector<8x128xf32>
    %318 = arith.mulf %317, %316 : vector<8x128xf32>
    %319 = math.tanh %318 : vector<8x128xf32>
    %320 = vector.broadcast %1 : vector<1x128xf32> to vector<8x128xf32>
    %321 = arith.mulf %320, %319 : vector<8x128xf32>
    %322 = vector.broadcast %2 : vector<1x128xf32> to vector<8x128xf32>
    %323 = arith.addf %321, %322 : vector<8x128xf32>
    %324 = vector.extract_strided_slice %323 {offsets = [0, 0], sizes = [8, 32], strides = [1, 1]} : vector<8x128xf32> to vector<8x32xf32>
    %325 = vector.extract_strided_slice %323 {offsets = [0, 32], sizes = [8, 32], strides = [1, 1]} : vector<8x128xf32> to vector<8x32xf32>
    %326 = vector.extract_strided_slice %323 {offsets = [0, 64], sizes = [8, 32], strides = [1, 1]} : vector<8x128xf32> to vector<8x32xf32>
    %327 = vector.extract_strided_slice %323 {offsets = [0, 96], sizes = [8, 32], strides = [1, 1]} : vector<8x128xf32> to vector<8x32xf32>
    %328 = arith.mulf %325, %284 : vector<8x32xf32>
    %329 = arith.mulf %324, %326 : vector<8x32xf32>
    %330 = arith.addf %328, %329 : vector<8x32xf32>
    %331 = math.tanh %330 : vector<8x32xf32>
    %332 = arith.mulf %327, %331 : vector<8x32xf32>
    %333 = arith.index_cast %290 : i32 to index
    %c0_65 = arith.constant 0 : index
    %334 = vector.load %arg14[%333, %c0_65] : memref<64x32xf32, #tpu.memory_space<vmem>>, vector<8x32xf32>
    tpu.vector_store %arg14[%333, %c0_65], %332 {strides = array<i32>} : memref<64x32xf32, #tpu.memory_space<vmem>>, vector<8x32xf32>,
    %c7_i32 = arith.constant 7 : i32
    %c8_i32_66 = arith.constant 8 : i32
    %335 = arith.muli %c7_i32, %c8_i32_66 : i32
    %336 = tpu.assume_multiple %335, 8 : i32
    %337 = arith.index_cast %336 : i32 to index
    %c0_67 = arith.constant 0 : index
    %338 = vector.load %arg13[%337, %c0_67] : memref<64x128xf32, #tpu.memory_space<vmem>>, vector<8x128xf32>
    %339 = arith.truncf %311 : vector<8x32xf32> to vector<8x32xbf16>
    %cst_68 = arith.constant dense<0.000000e+00> : vector<8x128xf32>
    %340 = tpu.matmul %339, %3, %cst_68 {dimension_numbers = #tpu.dot_dimension_numbers<[1], [0], [0], [1], [0, 0, 1, 1], [], []>} : vector<8x32xbf16>, vector<32x128xbf16>, vector<8x128xf32> -> vector<8x128xf32>
    %341 = arith.addf %338, %340 : vector<8x128xf32>
    %cst_69 = arith.constant 5.000000e-01 : f32
    %342 = vector.broadcast %cst_69 : f32 to vector<8x128xf32>
    %343 = arith.mulf %342, %341 : vector<8x128xf32>
    %344 = math.tanh %343 : vector<8x128xf32>
    %345 = vector.broadcast %1 : vector<1x128xf32> to vector<8x128xf32>
    %346 = arith.mulf %345, %344 : vector<8x128xf32>
    %347 = vector.broadcast %2 : vector<1x128xf32> to vector<8x128xf32>
    %348 = arith.addf %346, %347 : vector<8x128xf32>
    %349 = vector.extract_strided_slice %348 {offsets = [0, 0], sizes = [8, 32], strides = [1, 1]} : vector<8x128xf32> to vector<8x32xf32>
    %350 = vector.extract_strided_slice %348 {offsets = [0, 32], sizes = [8, 32], strides = [1, 1]} : vector<8x128xf32> to vector<8x32xf32>
    %351 = vector.extract_strided_slice %348 {offsets = [0, 64], sizes = [8, 32], strides = [1, 1]} : vector<8x128xf32> to vector<8x32xf32>
    %352 = vector.extract_strided_slice %348 {offsets = [0, 96], sizes = [8, 32], strides = [1, 1]} : vector<8x128xf32> to vector<8x32xf32>
    %353 = arith.mulf %350, %309 : vector<8x32xf32>
    %354 = arith.mulf %349, %351 : vector<8x32xf32>
    %355 = arith.addf %353, %354 : vector<8x32xf32>
    %356 = math.tanh %355 : vector<8x32xf32>
    %357 = arith.mulf %352, %356 : vector<8x32xf32>
    %358 = tpu.concatenate %357, %332 in 1 : vector<8x32xf32>, vector<8x32xf32> -> vector<8x64xf32>
    %359 = arith.truncf %358 : vector<8x64xf32> to vector<8x64xbf16>
    %cst_70 = arith.constant dense<0.000000e+00> : vector<8x128xf32>
    %360 = tpu.matmul %359, %4, %cst_70 {dimension_numbers = #tpu.dot_dimension_numbers<[1], [0], [0], [1], [0, 0, 1, 1], [], []>} : vector<8x64xbf16>, vector<64x128xbf16>, vector<8x128xf32> -> vector<8x128xf32>
    %361 = vector.broadcast %0 : vector<1x128xf32> to vector<8x128xf32>
    %362 = arith.addf %360, %361 : vector<8x128xf32>
    %cst_71 = arith.constant 5.000000e-01 : f32
    %363 = vector.broadcast %cst_71 : f32 to vector<8x128xf32>
    %364 = arith.mulf %363, %362 : vector<8x128xf32>
    %365 = math.tanh %364 : vector<8x128xf32>
    %366 = vector.broadcast %1 : vector<1x128xf32> to vector<8x128xf32>
    %367 = arith.mulf %366, %365 : vector<8x128xf32>
    %368 = vector.broadcast %2 : vector<1x128xf32> to vector<8x128xf32>
    %369 = arith.addf %367, %368 : vector<8x128xf32>
    %370 = vector.extract_strided_slice %369 {offsets = [0, 0], sizes = [8, 32], strides = [1, 1]} : vector<8x128xf32> to vector<8x32xf32>
    %371 = vector.extract_strided_slice %369 {offsets = [0, 32], sizes = [8, 32], strides = [1, 1]} : vector<8x128xf32> to vector<8x32xf32>
    %372 = vector.extract_strided_slice %369 {offsets = [0, 64], sizes = [8, 32], strides = [1, 1]} : vector<8x128xf32> to vector<8x32xf32>
    %373 = vector.extract_strided_slice %369 {offsets = [0, 96], sizes = [8, 32], strides = [1, 1]} : vector<8x128xf32> to vector<8x32xf32>
    %374 = arith.mulf %371, %330 : vector<8x32xf32>
    %375 = arith.mulf %370, %372 : vector<8x32xf32>
    %376 = arith.addf %374, %375 : vector<8x32xf32>
    %377 = math.tanh %376 : vector<8x32xf32>
    %378 = arith.mulf %373, %377 : vector<8x32xf32>
    %379 = arith.index_cast %336 : i32 to index
    %c0_72 = arith.constant 0 : index
    %380 = vector.load %arg14[%379, %c0_72] : memref<64x32xf32, #tpu.memory_space<vmem>>, vector<8x32xf32>
    tpu.vector_store %arg14[%379, %c0_72], %378 {strides = array<i32>} : memref<64x32xf32, #tpu.memory_space<vmem>>, vector<8x32xf32>,
    %c8_i32_73 = arith.constant 8 : i32
    %c0_74 = arith.constant 0 : index
    %c0_75 = arith.constant 0 : index
    %381 = vector.load %arg14[%c0_74, %c0_75] : memref<64x32xf32, #tpu.memory_space<vmem>>, vector<64x32xf32>
    %c0_76 = arith.constant 0 : index
    %c0_77 = arith.constant 0 : index
    %382 = vector.load %arg6[%c0_76, %c0_77] : memref<32x16xf32, #tpu.memory_space<vmem>>, vector<32x16xf32>
    %cst_78 = arith.constant dense<0.000000e+00> : vector<64x16xf32>
    %383 = tpu.matmul %381, %382, %cst_78 {dimension_numbers = #tpu.dot_dimension_numbers<[1], [0], [0], [1], [0, 0, 1, 1], [], []>} : vector<64x32xf32>, vector<32x16xf32>, vector<64x16xf32> -> vector<64x16xf32>
    %c0_79 = arith.constant 0 : index
    %c0_80 = arith.constant 0 : index
    %384 = vector.load %arg7[%c0_79, %c0_80] : memref<1x16xf32, #tpu.memory_space<vmem>>, vector<1x16xf32>
    %385 = vector.broadcast %384 : vector<1x16xf32> to vector<64x16xf32>
    %386 = arith.addf %383, %385 : vector<64x16xf32>
    %cst_81 = arith.constant 0.000000e+00 : f32
    %387 = vector.broadcast %cst_81 : f32 to vector<64x16xf32>
    %388 = arith.maximumf %386, %387 : vector<64x16xf32>
    %c0_82 = arith.constant 0 : index
    %c0_83 = arith.constant 0 : index
    %389 = vector.load %arg8[%c0_82, %c0_83] : memref<16x8xf32, #tpu.memory_space<vmem>>, vector<16x8xf32>
    %cst_84 = arith.constant dense<0.000000e+00> : vector<64x8xf32>
    %390 = tpu.matmul %388, %389, %cst_84 {dimension_numbers = #tpu.dot_dimension_numbers<[1], [0], [0], [1], [0, 0, 1, 1], [], []>} : vector<64x16xf32>, vector<16x8xf32>, vector<64x8xf32> -> vector<64x8xf32>
    %c0_85 = arith.constant 0 : index
    %c0_86 = arith.constant 0 : index
    %391 = vector.load %arg9[%c0_85, %c0_86] : memref<1x8xf32, #tpu.memory_space<vmem>>, vector<1x8xf32>
    %392 = vector.broadcast %391 : vector<1x8xf32> to vector<64x8xf32>
    %393 = arith.addf %390, %392 : vector<64x8xf32>
    %c0_87 = arith.constant 0 : index
    %c0_88 = arith.constant 0 : index
    %394 = vector.load %arg12[%c0_87, %c0_88] : memref<64x8xf32, #tpu.memory_space<vmem>>, vector<64x8xf32>
    tpu.vector_store %arg12[%c0_87, %c0_88], %393 {strides = array<i32>} : memref<64x8xf32, #tpu.memory_space<vmem>>, vector<64x8xf32>,
    return
  }
}

</mosaic_0001>

<llo_original>
// kernel: tpu_custom_call.1
$region0: #{tpu_custom_call.1}
  #allocation0 [shape = 'u32[]', space=smem, size = 0x4, offset = 0x4, fixed_abs, tag = 'smem constant byte address 0x4 - core index']
  #allocation1 [shape = 'u32[72,128]{1,0:T(1,128)}', space=vmem, size = 0x9000, scoped, tag = 'internal scratch']
  #allocation2 [shape = 'f32[64,128]{1,0:T(8,128)}', space=vmem, size = 0x8000, scoped, tag = 'scratch operand']
  #allocation3 [shape = 'f32[64,32]{1,0:T(8,128)}', space=vmem, size = 0x8000, scoped, tag = 'scratch operand']
  %s0 = inlined_call_operand.vmem [shape: f32[64,8], index: 0, kind: input, shape index: {}]
  %s1 = inlined_call_operand.vmem [shape: f32[8,128], index: 1, kind: input, shape index: {}]
  %s2 = inlined_call_operand.vmem [shape: bf16[32,128], index: 2, kind: input, shape index: {}]
  %s3 = inlined_call_operand.vmem [shape: f32[1,128], index: 3, kind: input, shape index: {}]
  %s4 = inlined_call_operand.vmem [shape: bf16[64,128], index: 4, kind: input, shape index: {}]
  %s5 = inlined_call_operand.vmem [shape: f32[1,128], index: 5, kind: input, shape index: {}]
  %s6 = inlined_call_operand.vmem [shape: f32[32,16], index: 6, kind: input, shape index: {}]
  %s7 = inlined_call_operand.vmem [shape: f32[1,16], index: 7, kind: input, shape index: {}]
  %s8 = inlined_call_operand.vmem [shape: f32[16,8], index: 8, kind: input, shape index: {}]
  %s9 = inlined_call_operand.vmem [shape: f32[1,8], index: 9, kind: input, shape index: {}]
  %s10 = inlined_call_operand.vmem [shape: f32[1,128], index: 10, kind: input, shape index: {}]
  %s11 = inlined_call_operand.vmem [shape: f32[1,128], index: 11, kind: input, shape index: {}]
  %s12 = inlined_call_operand.vmem [shape: f32[64,8], index: 12, kind: output, shape index: {}]
  %s13 = sld [smem:[#allocation0]]
  $region58: #{tpu_custom_call.1} parent=0
    _
  %s15 = ssub.s32 1, %s13
  %s16 = scalar_select 0, %s15, %s13
  // Predicated region
  $region2: #{tpu_custom_call.1} parent=0 // pred_check
    _
  $region3: #{tpu_custom_call.1} parent=0 // pred_check_branch
    %18 = sbr.rel (0) target = $region5
  $region4: #{tpu_custom_call.1} parent=0 // pred_region
    _
  $region5: #{tpu_custom_call.1} parent=0 // pred_fallthru
    _
  // Predicated region
  $region6: #{tpu_custom_call.1} parent=0 // pred_check
    _
  $region7: #{tpu_custom_call.1} parent=0 // pred_check_branch
    %20 = sbr.rel (0) target = $region9
  $region8: #{tpu_custom_call.1} parent=0 // pred_region
    _
  $region9: #{tpu_custom_call.1} parent=0 // pred_fallthru
    _
  // Predicated region
  $region10: #{tpu_custom_call.1} parent=0 // pred_check
    _
  $region11: #{tpu_custom_call.1} parent=0 // pred_check_branch
    %22 = sbr.rel (0) target = $region13
  $region12: #{tpu_custom_call.1} parent=0 // pred_region
    _
  $region13: #{tpu_custom_call.1} parent=0 // pred_fallthru
    _
  // Predicated region
  $region14: #{tpu_custom_call.1} parent=0 // pred_check
    _
  $region15: #{tpu_custom_call.1} parent=0 // pred_check_branch
    %24 = sbr.rel (0) target = $region17
  $region16: #{tpu_custom_call.1} parent=0 // pred_region
    _
  $region17: #{tpu_custom_call.1} parent=0 // pred_fallthru
    _
  // Predicated region
  $region18: #{tpu_custom_call.1} parent=0 // pred_check
    _
  $region19: #{tpu_custom_call.1} parent=0 // pred_check_branch
    %26 = sbr.rel (0) target = $region21
  $region20: #{tpu_custom_call.1} parent=0 // pred_region
    _
  $region21: #{tpu_custom_call.1} parent=0 // pred_fallthru
    _
  // Predicated region
  $region22: #{tpu_custom_call.1} parent=0 // pred_check
    _
  $region23: #{tpu_custom_call.1} parent=0 // pred_check_branch
    %28 = sbr.rel (0) target = $region25
  $region24: #{tpu_custom_call.1} parent=0 // pred_region
    _
  $region25: #{tpu_custom_call.1} parent=0 // pred_fallthru
    _
  // Predicated region
  $region26: #{tpu_custom_call.1} parent=0 // pred_check
    _
  $region27: #{tpu_custom_call.1} parent=0 // pred_check_branch
    %30 = sbr.rel (0) target = $region29
  $region28: #{tpu_custom_call.1} parent=0 // pred_region
    _
  $region29: #{tpu_custom_call.1} parent=0 // pred_fallthru
    _
  // Predicated region
  $region30: #{tpu_custom_call.1} parent=0 // pred_check
    _
  $region31: #{tpu_custom_call.1} parent=0 // pred_check_branch
    %32 = sbr.rel (0) target = $region33
  $region32: #{tpu_custom_call.1} parent=0 // pred_region
    _
  $region33: #{tpu_custom_call.1} parent=0 // pred_fallthru
    _
  // Predicated region
  $region34: #{tpu_custom_call.1} parent=0 // pred_check
    _
  $region35: #{tpu_custom_call.1} parent=0 // pred_check_branch
    %34 = sbr.rel (0) target = $region37
  $region36: #{tpu_custom_call.1} parent=0 // pred_region
    _
  $region37: #{tpu_custom_call.1} parent=0 // pred_fallthru
    _
  // Predicated region
  $region38: #{tpu_custom_call.1} parent=0 // pred_check
    _
  $region39: #{tpu_custom_call.1} parent=0 // pred_check_branch
    %36 = sbr.rel (0) target = $region41
  $region40: #{tpu_custom_call.1} parent=0 // pred_region
    _
  $region41: #{tpu_custom_call.1} parent=0 // pred_fallthru
    _
  // Predicated region
  $region42: #{tpu_custom_call.1} parent=0 // pred_check
    _
  $region43: #{tpu_custom_call.1} parent=0 // pred_check_branch
    %38 = sbr.rel (0) target = $region45
  $region44: #{tpu_custom_call.1} parent=0 // pred_region
    _
  $region45: #{tpu_custom_call.1} parent=0 // pred_fallthru
    _
  // Predicated region
  $region46: #{tpu_custom_call.1} parent=0 // pred_check
    _
  $region47: #{tpu_custom_call.1} parent=0 // pred_check_branch
    %40 = sbr.rel (0) target = $region49
  $region48: #{tpu_custom_call.1} parent=0 // pred_region
    _
  $region49: #{tpu_custom_call.1} parent=0 // pred_fallthru
    _
  %v42 = vld [vmem:[%s5] sm:$0x1]
  %v43 = vld [vmem:[%s10] sm:$0x1]
  %v44 = vld [vmem:[%s11] sm:$0x1]
  %v45 = vld [vmem:[%s2] sm:$0xf]
  %v46 = vld [vmem:[%s2 + $0x4] sm:$0xf]
  %v47 = vld [vmem:[%s2 + $0x8] sm:$0xf]
  %v48 = vld [vmem:[%s2 + $0xc] sm:$0xf]
  %v49 = vld [vmem:[%s4] sm:$0xf]
  %v50 = vld [vmem:[%s4 + $0x4] sm:$0xf]
  %v51 = vld [vmem:[%s4 + $0x8] sm:$0xf]
  %v52 = vld [vmem:[%s4 + $0xc] sm:$0xf]
  %v53 = vld [vmem:[%s4 + $0x10] sm:$0xf]
  %v54 = vld [vmem:[%s4 + $0x14] sm:$0xf]
  %v55 = vld [vmem:[%s4 + $0x18] sm:$0xf]
  %v56 = vld [vmem:[%s4 + $0x1c] sm:$0xf]
  %v57 = vld [vmem:[%s0] sm:$0xff]
  %v58 = vld [vmem:[%s0 + $0x8] sm:$0xff]
  %v59 = vld [vmem:[%s0 + $0x10] sm:$0xff]
  %v60 = vld [vmem:[%s0 + $0x18] sm:$0xff]
  %v61 = vld [vmem:[%s0 + $0x20] sm:$0xff]
  %v62 = vld [vmem:[%s0 + $0x28] sm:$0xff]
  %v63 = vld [vmem:[%s0 + $0x30] sm:$0xff]
  %v64 = vld [vmem:[%s0 + $0x38] sm:$0xff]
  %v65 = vld [vmem:[%s1] sm:$0xff]
  %v66 = vld [vmem:[%s3] sm:$0x1]
  %v68 = vperm.slane %v66, 0
  %vm70 = vcmask 64512
  %v72 = vsel %vm70, %v57, 0
  %v75 = vsel %vm70, %v58, 0
  %v78 = vsel %vm70, %v59, 0
  %v81 = vsel %vm70, %v60, 0
  %v84 = vsel %vm70, %v61, 0
  %v87 = vsel %vm70, %v62, 0
  %v90 = vsel %vm70, %v63, 0
  %v93 = vsel %vm70, %v64, 0
  %95 = vmatpush.msra.mxu0 0.0
  %96 = vmatpush.msra.mxu0 0.0
  %97 = vmatpush.msra.mxu0 0.0
  %98 = vmatpush.msra.mxu0 0.0
  %99 = vmatpush.msra.mxu0 0.0
  %100 = vmatpush.msra.mxu0 0.0
  %101 = vmatpush.msra.mxu0 0.0
  %102 = vmatpush.msra.mxu0 0.0
  %103 = vmatpush.msra.mxu0 0.0
  %104 = vmatpush.msra.mxu0 0.0
  %105 = vmatpush.msra.mxu0 0.0
  %106 = vmatpush.msra.mxu0 0.0
  %107 = vmatpush.msra.mxu0 0.0
  %108 = vmatpush.msra.mxu0 0.0
  %109 = vmatpush.msra.mxu0 0.0
  %110 = vmatpush.msra.mxu0 %v65
  %111 = vmatmul.f32.gmra.mxu0 %v72
  %v112 = vpop.f32.mrf.mxu0
  %v113 = vadd.f32 %v68, %v112
  %114 = vmatmul.f32.gmra.mxu0 %v75
  %v115 = vpop.f32.mrf.mxu0
  %v116 = vadd.f32 %v68, %v115
  %117 = vmatmul.f32.gmra.mxu0 %v78
  %v118 = vpop.f32.mrf.mxu0
  %v119 = vadd.f32 %v68, %v118
  %120 = vmatmul.f32.gmra.mxu0 %v81
  %v121 = vpop.f32.mrf.mxu0
  %v122 = vadd.f32 %v68, %v121
  %123 = vmatmul.f32.gmra.mxu0 %v84
  %v124 = vpop.f32.mrf.mxu0
  %v125 = vadd.f32 %v68, %v124
  %126 = vmatmul.f32.gmra.mxu0 %v87
  %v127 = vpop.f32.mrf.mxu0
  %v128 = vadd.f32 %v68, %v127
  %129 = vmatmul.f32.gmra.mxu0 %v90
  %v130 = vpop.f32.mrf.mxu0
  %v131 = vadd.f32 %v68, %v130
  %132 = vmatmul.f32.gmra.mxu0 %v93
  %v133 = vpop.f32.mrf.mxu0
  %v134 = vadd.f32 %v68, %v133
  %135 = vdwg.mxu0
  %136 = vst [vmem:[#allocation2] sm:$0xff] %v113
  %137 = vst [vmem:[#allocation2 + $0x8] sm:$0xff] %v116
  %138 = vst [vmem:[#allocation2 + $0x10] sm:$0xff] %v119
  %139 = vst [vmem:[#allocation2 + $0x18] sm:$0xff] %v122
  %140 = vst [vmem:[#allocation2 + $0x20] sm:$0xff] %v125
  %141 = vst [vmem:[#allocation2 + $0x28] sm:$0xff] %v128
  %142 = vst [vmem:[#allocation2 + $0x30] sm:$0xff] %v131
  %143 = vst [vmem:[#allocation2 + $0x38] sm:$0xff] %v134
  %v144 = vld [vmem:[#allocation2] sm:$0xff]
  %v149 = vunpack.c.l.b16 %v45
  %v150 = vunpack.c.l.b16 %v46
  %v151 = vunpack.c.l.b16 %v47
  %v152 = vunpack.c.l.b16 %v48
  %v153 = vpack.c.b16 %v150, %v149
  %v154 = vpack.c.b16 %v152, %v151
  %vm157 = vcmask 261120
  %v159 = vsel %vm157, 0, 0
  %161 = vmatpush.bf16.msra.mxu0 0
  %162 = vmatpush.bf16.msra.mxu0 0
  %163 = vmatpush.bf16.msra.mxu0 0
  %164 = vmatpush.bf16.msra.mxu0 0
  %165 = vmatpush.bf16.msra.mxu0 0
  %166 = vmatpush.bf16.msra.mxu0 0
  %167 = vmatpush.bf16.msra.mxu0 %v154
  %168 = vmatpush.bf16.msra.mxu0 %v153
  %169 = vmatmul.bf16.gmra.mxu0 %v159
  %v170 = vpop.f32.mrf.mxu0
  %v171 = vadd.f32 0.0, %v170
  %v172 = vpop.f32.mrf.mxu0
  %173 = vdwg.mxu0
  %v174 = vadd.f32 %v144, %v171
  %v175 = vmul.f32 %v174, 0.5
  %v176 = vtanh.pop %v175
  %v178 = vperm.slane %v43, 0
  %v180 = vmul.f32 %v178, %v176
  %v182 = vperm.slane %v44, 0
  %v184 = vadd.f32 %v180, %v182
  %v185 = vmul.f32 %v184, 0.0
  %187 = vrot.lane.b32.xlu0 %v184, 64
  %v188 = vpop.permute.xlu0 %187
  %v190 = vmul.f32 %v184, %v188
  %192 = vrot.lane.b32.xlu0 %v190, 32
  %v193 = vpop.permute.xlu0 %192
  %v195 = vadd.f32 %v185, %v193
  %v196 = vtanh.pop %v195
  %198 = vrot.lane.b32.xlu0 %v196, 64
  %v199 = vpop.permute.xlu0 %198
  %v201 = vmul.f32 %v184, %v199
  %203 = vrot.lane.b32.xlu0 %v201, 32
  %v204 = vpop.permute.xlu0 %203
  %v206 = vsel %vm157, %v204, 0.0
  %v207 = vpack.c.bf16 %v206, %v206
  %v209 = vperm.slane %v42, 0
  %v219 = vunpack.c.l.b16 %v49
  %v220 = vunpack.c.l.b16 %v50
  %v221 = vunpack.c.l.b16 %v51
  %v222 = vunpack.c.l.b16 %v52
  %v223 = vunpack.c.l.b16 %v53
  %v224 = vunpack.c.l.b16 %v54
  %v225 = vunpack.c.l.b16 %v55
  %v226 = vunpack.c.l.b16 %v56
  %v227 = vpack.c.b16 %v220, %v219
  %v228 = vpack.c.b16 %v222, %v221
  %v229 = vpack.c.b16 %v224, %v223
  %v230 = vpack.c.b16 %v226, %v225
  %vm235 = vcmask 523264
  %v237 = vsel %vm235, %v207, 0
  %239 = vmatpush.bf16.msra.mxu0 0
  %240 = vmatpush.bf16.msra.mxu0 0
  %241 = vmatpush.bf16.msra.mxu0 0
  %242 = vmatpush.bf16.msra.mxu0 0
  %243 = vmatpush.bf16.msra.mxu0 %v230
  %244 = vmatpush.bf16.msra.mxu0 %v229
  %245 = vmatpush.bf16.msra.mxu0 %v228
  %246 = vmatpush.bf16.msra.mxu0 %v227
  %247 = vmatmul.bf16.gmra.mxu0 %v237
  %v248 = vpop.f32.mrf.mxu0
  %v249 = vadd.f32 %v209, %v248
  %v250 = vpop.f32.mrf.mxu0
  %251 = vdwg.mxu0
  %v252 = vmul.f32 %v249, 0.5
  %v253 = vtanh.pop %v252
  %v254 = vmul.f32 %v178, %v253
  %v255 = vadd.f32 %v254, %v182
  %v256 = vmul.f32 %v255, 0.0
  %258 = vrot.lane.b32.xlu0 %v255, 64
  %v259 = vpop.permute.xlu0 %258
  %v261 = vmul.f32 %v255, %v259
  %263 = vrot.lane.b32.xlu0 %v261, 32
  %v264 = vpop.permute.xlu0 %263
  %v266 = vadd.f32 %v256, %v264
  %v267 = vtanh.pop %v266
  %269 = vrot.lane.b32.xlu0 %v267, 64
  %v270 = vpop.permute.xlu0 %269
  %v272 = vmul.f32 %v255, %v270
  %274 = vrot.lane.b32.xlu0 %v272, 32
  %v275 = vpop.permute.xlu0 %274
  %277 = vst.msk [vmem:[#allocation3] sm:$0xff] %vm157, %v275
  %s278 = scalar_lea.vmem [#allocation2], 8
  %v279 = vld [vmem:[%s278] sm:$0xff]
  %v280 = vpack.c.bf16 %v201, %v201
  %282 = vrot.lane.b32.xlu0 %v280, 32
  %v283 = vpop.permute.xlu0 %282
  %v285 = vsel %vm157, %v283, 0
  %287 = vmatpush.bf16.msra.mxu0 0
  %288 = vmatpush.bf16.msra.mxu0 0
  %289 = vmatpush.bf16.msra.mxu0 0
  %290 = vmatpush.bf16.msra.mxu0 0
  %291 = vmatpush.bf16.msra.mxu0 0
  %292 = vmatpush.bf16.msra.mxu0 0
  %293 = vmatpush.bf16.msra.mxu0 %v154
  %294 = vmatpush.bf16.msra.mxu0 %v153
  %295 = vmatmul.bf16.gmra.mxu0 %v285
  %v296 = vpop.f32.mrf.mxu0
  %v297 = vadd.f32 0.0, %v296
  %v298 = vpop.f32.mrf.mxu0
  %299 = vdwg.mxu0
  %v300 = vadd.f32 %v279, %v297
  %v301 = vmul.f32 %v300, 0.5
  %v302 = vtanh.pop %v301
  %v303 = vmul.f32 %v178, %v302
  %v304 = vadd.f32 %v303, %v182
  %v305 = vmul.f32 %v304, %v195
  %307 = vrot.lane.b32.xlu0 %v304, 64
  %v308 = vpop.permute.xlu0 %307
  %v310 = vmul.f32 %v304, %v308
  %312 = vrot.lane.b32.xlu0 %v310, 32
  %v313 = vpop.permute.xlu0 %312
  %v315 = vadd.f32 %v305, %v313
  %v316 = vtanh.pop %v315
  %318 = vrot.lane.b32.xlu0 %v316, 64
  %v319 = vpop.permute.xlu0 %318
  %v321 = vmul.f32 %v304, %v319
  %323 = vrot.lane.b32.xlu0 %v321, 32
  %v324 = vpop.permute.xlu0 %323
  %326 = vrot.lane.b32.xlu0 %v272, 64
  %v327 = vpop.permute.xlu0 %326
  %v329 = vsel %vm157, %v324, %v327
  %v330 = vpack.c.bf16 %v329, %v329
  %v332 = vsel %vm235, %v330, 0
  %334 = vmatpush.bf16.msra.mxu0 0
  %335 = vmatpush.bf16.msra.mxu0 0
  %336 = vmatpush.bf16.msra.mxu0 0
  %337 = vmatpush.bf16.msra.mxu0 0
  %338 = vmatpush.bf16.msra.mxu0 %v230
  %339 = vmatpush.bf16.msra.mxu0 %v229
  %340 = vmatpush.bf16.msra.mxu0 %v228
  %341 = vmatpush.bf16.msra.mxu0 %v227
  %342 = vmatmul.bf16.gmra.mxu0 %v332
  %v343 = vpop.f32.mrf.mxu0
  %v344 = vadd.f32 %v209, %v343
  %v345 = vpop.f32.mrf.mxu0
  %346 = vdwg.mxu0
  %v347 = vmul.f32 %v344, 0.5
  %v348 = vtanh.pop %v347
  %v349 = vmul.f32 %v178, %v348
  %v350 = vadd.f32 %v349, %v182
  %v351 = vmul.f32 %v350, %v266
  %353 = vrot.lane.b32.xlu0 %v350, 64
  %v354 = vpop.permute.xlu0 %353
  %v356 = vmul.f32 %v350, %v354
  %358 = vrot.lane.b32.xlu0 %v356, 32
  %v359 = vpop.permute.xlu0 %358
  %v361 = vadd.f32 %v351, %v359
  %v362 = vtanh.pop %v361
  %364 = vrot.lane.b32.xlu0 %v362, 64
  %v365 = vpop.permute.xlu0 %364
  %v367 = vmul.f32 %v350, %v365
  %369 = vrot.lane.b32.xlu0 %v367, 32
  %v370 = vpop.permute.xlu0 %369
  %s372 = scalar_lea.vmem [#allocation3], 8
  %373 = vst.msk [vmem:[%s372] sm:$0xff] %vm157, %v370
  %s374 = scalar_lea.vmem [#allocation2], 16
  %v375 = vld [vmem:[%s374] sm:$0xff]
  %v376 = vpack.c.bf16 %v321, %v321
  %378 = vrot.lane.b32.xlu0 %v376, 32
  %v379 = vpop.permute.xlu0 %378
  %v381 = vsel %vm157, %v379, 0
  %383 = vmatpush.bf16.msra.mxu0 0
  %384 = vmatpush.bf16.msra.mxu0 0
  %385 = vmatpush.bf16.msra.mxu0 0
  %386 = vmatpush.bf16.msra.mxu0 0
  %387 = vmatpush.bf16.msra.mxu0 0
  %388 = vmatpush.bf16.msra.mxu0 0
  %389 = vmatpush.bf16.msra.mxu0 %v154
  %390 = vmatpush.bf16.msra.mxu0 %v153
  %391 = vmatmul.bf16.gmra.mxu0 %v381
  %v392 = vpop.f32.mrf.mxu0
  %v393 = vadd.f32 0.0, %v392
  %v394 = vpop.f32.mrf.mxu0
  %395 = vdwg.mxu0
  %v396 = vadd.f32 %v375, %v393
  %v397 = vmul.f32 %v396, 0.5
  %v398 = vtanh.pop %v397
  %v399 = vmul.f32 %v178, %v398
  %v400 = vadd.f32 %v399, %v182
  %v401 = vmul.f32 %v400, %v315
  %403 = vrot.lane.b32.xlu0 %v400, 64
  %v404 = vpop.permute.xlu0 %403
  %v406 = vmul.f32 %v400, %v404
  %408 = vrot.lane.b32.xlu0 %v406, 32
  %v409 = vpop.permute.xlu0 %408
  %v411 = vadd.f32 %v401, %v409
  %v412 = vtanh.pop %v411
  %414 = vrot.lane.b32.xlu0 %v412, 64
  %v415 = vpop.permute.xlu0 %414
  %v417 = vmul.f32 %v400, %v415
  %419 = vrot.lane.b32.xlu0 %v417, 32
  %v420 = vpop.permute.xlu0 %419
  %422 = vrot.lane.b32.xlu0 %v367, 64
  %v423 = vpop.permute.xlu0 %422
  %v425 = vsel %vm157, %v420, %v423
  %v426 = vpack.c.bf16 %v425, %v425
  %v428 = vsel %vm235, %v426, 0
  %430 = vmatpush.bf16.msra.mxu0 0
  %431 = vmatpush.bf16.msra.mxu0 0
  %432 = vmatpush.bf16.msra.mxu0 0
  %433 = vmatpush.bf16.msra.mxu0 0
  %434 = vmatpush.bf16.msra.mxu0 %v230
  %435 = vmatpush.bf16.msra.mxu0 %v229
  %436 = vmatpush.bf16.msra.mxu0 %v228
  %437 = vmatpush.bf16.msra.mxu0 %v227
  %438 = vmatmul.bf16.gmra.mxu0 %v428
  %v439 = vpop.f32.mrf.mxu0
  %v440 = vadd.f32 %v209, %v439
  %v441 = vpop.f32.mrf.mxu0
  %442 = vdwg.mxu0
  %v443 = vmul.f32 %v440, 0.5
  %v444 = vtanh.pop %v443
  %v445 = vmul.f32 %v178, %v444
  %v446 = vadd.f32 %v445, %v182
  %v447 = vmul.f32 %v446, %v361
  %449 = vrot.lane.b32.xlu0 %v446, 64
  %v450 = vpop.permute.xlu0 %449
  %v452 = vmul.f32 %v446, %v450
  %454 = vrot.lane.b32.xlu0 %v452, 32
  %v455 = vpop.permute.xlu0 %454
  %v457 = vadd.f32 %v447, %v455
  %v458 = vtanh.pop %v457
  %460 = vrot.lane.b32.xlu0 %v458, 64
  %v461 = vpop.permute.xlu0 %460
  %v463 = vmul.f32 %v446, %v461
  %465 = vrot.lane.b32.xlu0 %v463, 32
  %v466 = vpop.permute.xlu0 %465
  %s468 = scalar_lea.vmem [#allocation3], 16
  %469 = vst.msk [vmem:[%s468] sm:$0xff] %vm157, %v466
  %s470 = scalar_lea.vmem [#allocation2], 24
  %v471 = vld [vmem:[%s470] sm:$0xff]
  %v472 = vpack.c.bf16 %v417, %v417
  %474 = vrot.lane.b32.xlu0 %v472, 32
  %v475 = vpop.permute.xlu0 %474
  %v477 = vsel %vm157, %v475, 0
  %479 = vmatpush.bf16.msra.mxu0 0
  %480 = vmatpush.bf16.msra.mxu0 0
  %481 = vmatpush.bf16.msra.mxu0 0
  %482 = vmatpush.bf16.msra.mxu0 0
  %483 = vmatpush.bf16.msra.mxu0 0
  %484 = vmatpush.bf16.msra.mxu0 0
  %485 = vmatpush.bf16.msra.mxu0 %v154
  %486 = vmatpush.bf16.msra.mxu0 %v153
  %487 = vmatmul.bf16.gmra.mxu0 %v477
  %v488 = vpop.f32.mrf.mxu0
  %v489 = vadd.f32 0.0, %v488
  %v490 = vpop.f32.mrf.mxu0
  %491 = vdwg.mxu0
  %v492 = vadd.f32 %v471, %v489
  %v493 = vmul.f32 %v492, 0.5
  %v494 = vtanh.pop %v493
  %v495 = vmul.f32 %v178, %v494
  %v496 = vadd.f32 %v495, %v182
  %v497 = vmul.f32 %v496, %v411
  %499 = vrot.lane.b32.xlu0 %v496, 64
  %v500 = vpop.permute.xlu0 %499
  %v502 = vmul.f32 %v496, %v500
  %504 = vrot.lane.b32.xlu0 %v502, 32
  %v505 = vpop.permute.xlu0 %504
  %v507 = vadd.f32 %v497, %v505
  %v508 = vtanh.pop %v507
  %510 = vrot.lane.b32.xlu0 %v508, 64
  %v511 = vpop.permute.xlu0 %510
  %v513 = vmul.f32 %v496, %v511
  %515 = vrot.lane.b32.xlu0 %v513, 32
  %v516 = vpop.permute.xlu0 %515
  %518 = vrot.lane.b32.xlu0 %v463, 64
  %v519 = vpop.permute.xlu0 %518
  %v521 = vsel %vm157, %v516, %v519
  %v522 = vpack.c.bf16 %v521, %v521
  %v524 = vsel %vm235, %v522, 0
  %526 = vmatpush.bf16.msra.mxu0 0
  %527 = vmatpush.bf16.msra.mxu0 0
  %528 = vmatpush.bf16.msra.mxu0 0
  %529 = vmatpush.bf16.msra.mxu0 0
  %530 = vmatpush.bf16.msra.mxu0 %v230
  %531 = vmatpush.bf16.msra.mxu0 %v229
  %532 = vmatpush.bf16.msra.mxu0 %v228
  %533 = vmatpush.bf16.msra.mxu0 %v227
  %534 = vmatmul.bf16.gmra.mxu0 %v524
  %v535 = vpop.f32.mrf.mxu0
  %v536 = vadd.f32 %v209, %v535
  %v537 = vpop.f32.mrf.mxu0
  %538 = vdwg.mxu0
  %v539 = vmul.f32 %v536, 0.5
  %v540 = vtanh.pop %v539
  %v541 = vmul.f32 %v178, %v540
  %v542 = vadd.f32 %v541, %v182
  %v543 = vmul.f32 %v542, %v457
  %545 = vrot.lane.b32.xlu0 %v542, 64
  %v546 = vpop.permute.xlu0 %545
  %v548 = vmul.f32 %v542, %v546
  %550 = vrot.lane.b32.xlu0 %v548, 32
  %v551 = vpop.permute.xlu0 %550
  %v553 = vadd.f32 %v543, %v551
  %v554 = vtanh.pop %v553
  %556 = vrot.lane.b32.xlu0 %v554, 64
  %v557 = vpop.permute.xlu0 %556
  %v559 = vmul.f32 %v542, %v557
  %561 = vrot.lane.b32.xlu0 %v559, 32
  %v562 = vpop.permute.xlu0 %561
  %s564 = scalar_lea.vmem [#allocation3], 24
  %565 = vst.msk [vmem:[%s564] sm:$0xff] %vm157, %v562
  %s566 = scalar_lea.vmem [#allocation2], 32
  %v567 = vld [vmem:[%s566] sm:$0xff]
  %v568 = vpack.c.bf16 %v513, %v513
  %570 = vrot.lane.b32.xlu0 %v568, 32
  %v571 = vpop.permute.xlu0 %570
  %v573 = vsel %vm157, %v571, 0
  %575 = vmatpush.bf16.msra.mxu0 0
  %576 = vmatpush.bf16.msra.mxu0 0
  %577 = vmatpush.bf16.msra.mxu0 0
  %578 = vmatpush.bf16.msra.mxu0 0
  %579 = vmatpush.bf16.msra.mxu0 0
  %580 = vmatpush.bf16.msra.mxu0 0
  %581 = vmatpush.bf16.msra.mxu0 %v154
  %582 = vmatpush.bf16.msra.mxu0 %v153
  %583 = vmatmul.bf16.gmra.mxu0 %v573
  %v584 = vpop.f32.mrf.mxu0
  %v585 = vadd.f32 0.0, %v584
  %v586 = vpop.f32.mrf.mxu0
  %587 = vdwg.mxu0
  %v588 = vadd.f32 %v567, %v585
  %v589 = vmul.f32 %v588, 0.5
  %v590 = vtanh.pop %v589
  %v591 = vmul.f32 %v178, %v590
  %v592 = vadd.f32 %v591, %v182
  %v593 = vmul.f32 %v592, %v507
  %595 = vrot.lane.b32.xlu0 %v592, 64
  %v596 = vpop.permute.xlu0 %595
  %v598 = vmul.f32 %v592, %v596
  %600 = vrot.lane.b32.xlu0 %v598, 32
  %v601 = vpop.permute.xlu0 %600
  %v603 = vadd.f32 %v593, %v601
  %v604 = vtanh.pop %v603
  %606 = vrot.lane.b32.xlu0 %v604, 64
  %v607 = vpop.permute.xlu0 %606
  %v609 = vmul.f32 %v592, %v607
  %611 = vrot.lane.b32.xlu0 %v609, 32
  %v612 = vpop.permute.xlu0 %611
  %614 = vrot.lane.b32.xlu0 %v559, 64
  %v615 = vpop.permute.xlu0 %614
  %v617 = vsel %vm157, %v612, %v615
  %v618 = vpack.c.bf16 %v617, %v617
  %v620 = vsel %vm235, %v618, 0
  %622 = vmatpush.bf16.msra.mxu0 0
  %623 = vmatpush.bf16.msra.mxu0 0
  %624 = vmatpush.bf16.msra.mxu0 0
  %625 = vmatpush.bf16.msra.mxu0 0
  %626 = vmatpush.bf16.msra.mxu0 %v230
  %627 = vmatpush.bf16.msra.mxu0 %v229
  %628 = vmatpush.bf16.msra.mxu0 %v228
  %629 = vmatpush.bf16.msra.mxu0 %v227
  %630 = vmatmul.bf16.gmra.mxu0 %v620
  %v631 = vpop.f32.mrf.mxu0
  %v632 = vadd.f32 %v209, %v631
  %v633 = vpop.f32.mrf.mxu0
  %634 = vdwg.mxu0
  %v635 = vmul.f32 %v632, 0.5
  %v636 = vtanh.pop %v635
  %v637 = vmul.f32 %v178, %v636
  %v638 = vadd.f32 %v637, %v182
  %v639 = vmul.f32 %v638, %v553
  %641 = vrot.lane.b32.xlu0 %v638, 64
  %v642 = vpop.permute.xlu0 %641
  %v644 = vmul.f32 %v638, %v642
  %646 = vrot.lane.b32.xlu0 %v644, 32
  %v647 = vpop.permute.xlu0 %646
  %v649 = vadd.f32 %v639, %v647
  %v650 = vtanh.pop %v649
  %652 = vrot.lane.b32.xlu0 %v650, 64
  %v653 = vpop.permute.xlu0 %652
  %v655 = vmul.f32 %v638, %v653
  %657 = vrot.lane.b32.xlu0 %v655, 32
  %v658 = vpop.permute.xlu0 %657
  %s660 = scalar_lea.vmem [#allocation3], 32
  %661 = vst.msk [vmem:[%s660] sm:$0xff] %vm157, %v658
  %s662 = scalar_lea.vmem [#allocation2], 40
  %v663 = vld [vmem:[%s662] sm:$0xff]
  %v664 = vpack.c.bf16 %v609, %v609
  %666 = vrot.lane.b32.xlu0 %v664, 32
  %v667 = vpop.permute.xlu0 %666
  %v669 = vsel %vm157, %v667, 0
  %671 = vmatpush.bf16.msra.mxu0 0
  %672 = vmatpush.bf16.msra.mxu0 0
  %673 = vmatpush.bf16.msra.mxu0 0
  %674 = vmatpush.bf16.msra.mxu0 0
  %675 = vmatpush.bf16.msra.mxu0 0
  %676 = vmatpush.bf16.msra.mxu0 0
  %677 = vmatpush.bf16.msra.mxu0 %v154
  %678 = vmatpush.bf16.msra.mxu0 %v153
  %679 = vmatmul.bf16.gmra.mxu0 %v669
  %v680 = vpop.f32.mrf.mxu0
  %v681 = vadd.f32 0.0, %v680
  %v682 = vpop.f32.mrf.mxu0
  %683 = vdwg.mxu0
  %v684 = vadd.f32 %v663, %v681
  %v685 = vmul.f32 %v684, 0.5
  %v686 = vtanh.pop %v685
  %v687 = vmul.f32 %v178, %v686
  %v688 = vadd.f32 %v687, %v182
  %v689 = vmul.f32 %v688, %v603
  %691 = vrot.lane.b32.xlu0 %v688, 64
  %v692 = vpop.permute.xlu0 %691
  %v694 = vmul.f32 %v688, %v692
  %696 = vrot.lane.b32.xlu0 %v694, 32
  %v697 = vpop.permute.xlu0 %696
  %v699 = vadd.f32 %v689, %v697
  %v700 = vtanh.pop %v699
  %702 = vrot.lane.b32.xlu0 %v700, 64
  %v703 = vpop.permute.xlu0 %702
  %v705 = vmul.f32 %v688, %v703
  %707 = vrot.lane.b32.xlu0 %v705, 32
  %v708 = vpop.permute.xlu0 %707
  %710 = vrot.lane.b32.xlu0 %v655, 64
  %v711 = vpop.permute.xlu0 %710
  %v713 = vsel %vm157, %v708, %v711
  %v714 = vpack.c.bf16 %v713, %v713
  %v716 = vsel %vm235, %v714, 0
  %718 = vmatpush.bf16.msra.mxu0 0
  %719 = vmatpush.bf16.msra.mxu0 0
  %720 = vmatpush.bf16.msra.mxu0 0
  %721 = vmatpush.bf16.msra.mxu0 0
  %722 = vmatpush.bf16.msra.mxu0 %v230
  %723 = vmatpush.bf16.msra.mxu0 %v229
  %724 = vmatpush.bf16.msra.mxu0 %v228
  %725 = vmatpush.bf16.msra.mxu0 %v227
  %726 = vmatmul.bf16.gmra.mxu0 %v716
  %v727 = vpop.f32.mrf.mxu0
  %v728 = vadd.f32 %v209, %v727
  %v729 = vpop.f32.mrf.mxu0
  %730 = vdwg.mxu0
  %v731 = vmul.f32 %v728, 0.5
  %v732 = vtanh.pop %v731
  %v733 = vmul.f32 %v178, %v732
  %v734 = vadd.f32 %v733, %v182
  %v735 = vmul.f32 %v734, %v649
  %737 = vrot.lane.b32.xlu0 %v734, 64
  %v738 = vpop.permute.xlu0 %737
  %v740 = vmul.f32 %v734, %v738
  %742 = vrot.lane.b32.xlu0 %v740, 32
  %v743 = vpop.permute.xlu0 %742
  %v745 = vadd.f32 %v735, %v743
  %v746 = vtanh.pop %v745
  %748 = vrot.lane.b32.xlu0 %v746, 64
  %v749 = vpop.permute.xlu0 %748
  %v751 = vmul.f32 %v734, %v749
  %753 = vrot.lane.b32.xlu0 %v751, 32
  %v754 = vpop.permute.xlu0 %753
  %s756 = scalar_lea.vmem [#allocation3], 40
  %757 = vst.msk [vmem:[%s756] sm:$0xff] %vm157, %v754
  %s758 = scalar_lea.vmem [#allocation2], 48
  %v759 = vld [vmem:[%s758] sm:$0xff]
  %v760 = vpack.c.bf16 %v705, %v705
  %762 = vrot.lane.b32.xlu0 %v760, 32
  %v763 = vpop.permute.xlu0 %762
  %v765 = vsel %vm157, %v763, 0
  %767 = vmatpush.bf16.msra.mxu0 0
  %768 = vmatpush.bf16.msra.mxu0 0
  %769 = vmatpush.bf16.msra.mxu0 0
  %770 = vmatpush.bf16.msra.mxu0 0
  %771 = vmatpush.bf16.msra.mxu0 0
  %772 = vmatpush.bf16.msra.mxu0 0
  %773 = vmatpush.bf16.msra.mxu0 %v154
  %774 = vmatpush.bf16.msra.mxu0 %v153
  %775 = vmatmul.bf16.gmra.mxu0 %v765
  %v776 = vpop.f32.mrf.mxu0
  %v777 = vadd.f32 0.0, %v776
  %v778 = vpop.f32.mrf.mxu0
  %779 = vdwg.mxu0
  %v780 = vadd.f32 %v759, %v777
  %v781 = vmul.f32 %v780, 0.5
  %v782 = vtanh.pop %v781
  %v783 = vmul.f32 %v178, %v782
  %v784 = vadd.f32 %v783, %v182
  %v785 = vmul.f32 %v784, %v699
  %787 = vrot.lane.b32.xlu0 %v784, 64
  %v788 = vpop.permute.xlu0 %787
  %v790 = vmul.f32 %v784, %v788
  %792 = vrot.lane.b32.xlu0 %v790, 32
  %v793 = vpop.permute.xlu0 %792
  %v795 = vadd.f32 %v785, %v793
  %v796 = vtanh.pop %v795
  %798 = vrot.lane.b32.xlu0 %v796, 64
  %v799 = vpop.permute.xlu0 %798
  %v801 = vmul.f32 %v784, %v799
  %803 = vrot.lane.b32.xlu0 %v801, 32
  %v804 = vpop.permute.xlu0 %803
  %806 = vrot.lane.b32.xlu0 %v751, 64
  %v807 = vpop.permute.xlu0 %806
  %v809 = vsel %vm157, %v804, %v807
  %v810 = vpack.c.bf16 %v809, %v809
  %v812 = vsel %vm235, %v810, 0
  %814 = vmatpush.bf16.msra.mxu0 0
  %815 = vmatpush.bf16.msra.mxu0 0
  %816 = vmatpush.bf16.msra.mxu0 0
  %817 = vmatpush.bf16.msra.mxu0 0
  %818 = vmatpush.bf16.msra.mxu0 %v230
  %819 = vmatpush.bf16.msra.mxu0 %v229
  %820 = vmatpush.bf16.msra.mxu0 %v228
  %821 = vmatpush.bf16.msra.mxu0 %v227
  %822 = vmatmul.bf16.gmra.mxu0 %v812
  %v823 = vpop.f32.mrf.mxu0
  %v824 = vadd.f32 %v209, %v823
  %v825 = vpop.f32.mrf.mxu0
  %826 = vdwg.mxu0
  %v827 = vmul.f32 %v824, 0.5
  %v828 = vtanh.pop %v827
  %v829 = vmul.f32 %v178, %v828
  %v830 = vadd.f32 %v829, %v182
  %v831 = vmul.f32 %v830, %v745
  %833 = vrot.lane.b32.xlu0 %v830, 64
  %v834 = vpop.permute.xlu0 %833
  %v836 = vmul.f32 %v830, %v834
  %838 = vrot.lane.b32.xlu0 %v836, 32
  %v839 = vpop.permute.xlu0 %838
  %v841 = vadd.f32 %v831, %v839
  %v842 = vtanh.pop %v841
  %844 = vrot.lane.b32.xlu0 %v842, 64
  %v845 = vpop.permute.xlu0 %844
  %v847 = vmul.f32 %v830, %v845
  %849 = vrot.lane.b32.xlu0 %v847, 32
  %v850 = vpop.permute.xlu0 %849
  %s852 = scalar_lea.vmem [#allocation3], 48
  %853 = vst.msk [vmem:[%s852] sm:$0xff] %vm157, %v850
  %s854 = scalar_lea.vmem [#allocation2], 56
  %v855 = vld [vmem:[%s854] sm:$0xff]
  %v856 = vpack.c.bf16 %v801, %v801
  %858 = vrot.lane.b32.xlu0 %v856, 32
  %v859 = vpop.permute.xlu0 %858
  %v861 = vsel %vm157, %v859, 0
  %863 = vmatpush.bf16.msra.mxu0 0
  %864 = vmatpush.bf16.msra.mxu0 0
  %865 = vmatpush.bf16.msra.mxu0 0
  %866 = vmatpush.bf16.msra.mxu0 0
  %867 = vmatpush.bf16.msra.mxu0 0
  %868 = vmatpush.bf16.msra.mxu0 0
  %869 = vmatpush.bf16.msra.mxu0 %v154
  %870 = vmatpush.bf16.msra.mxu0 %v153
  %871 = vmatmul.bf16.gmra.mxu0 %v861
  %v872 = vpop.f32.mrf.mxu0
  %v873 = vadd.f32 0.0, %v872
  %v874 = vpop.f32.mrf.mxu0
  %875 = vdwg.mxu0
  %v876 = vadd.f32 %v855, %v873
  %v877 = vmul.f32 %v876, 0.5
  %v878 = vtanh.pop %v877
  %v879 = vmul.f32 %v178, %v878
  %v880 = vadd.f32 %v879, %v182
  %v881 = vmul.f32 %v880, %v795
  %883 = vrot.lane.b32.xlu0 %v880, 64
  %v884 = vpop.permute.xlu0 %883
  %v886 = vmul.f32 %v880, %v884
  %888 = vrot.lane.b32.xlu0 %v886, 32
  %v889 = vpop.permute.xlu0 %888
  %v891 = vadd.f32 %v881, %v889
  %v892 = vtanh.pop %v891
  %894 = vrot.lane.b32.xlu0 %v892, 64
  %v895 = vpop.permute.xlu0 %894
  %v897 = vmul.f32 %v880, %v895
  %899 = vrot.lane.b32.xlu0 %v897, 32
  %v900 = vpop.permute.xlu0 %899
  %902 = vrot.lane.b32.xlu0 %v847, 64
  %v903 = vpop.permute.xlu0 %902
  %v905 = vsel %vm157, %v900, %v903
  %v906 = vpack.c.bf16 %v905, %v905
  %v908 = vsel %vm235, %v906, 0
  %910 = vmatpush.bf16.msra.mxu0 0
  %911 = vmatpush.bf16.msra.mxu0 0
  %912 = vmatpush.bf16.msra.mxu0 0
  %913 = vmatpush.bf16.msra.mxu0 0
  %914 = vmatpush.bf16.msra.mxu0 %v230
  %915 = vmatpush.bf16.msra.mxu0 %v229
  %916 = vmatpush.bf16.msra.mxu0 %v228
  %917 = vmatpush.bf16.msra.mxu0 %v227
  %918 = vmatmul.bf16.gmra.mxu0 %v908
  %v919 = vpop.f32.mrf.mxu0
  %v920 = vadd.f32 %v209, %v919
  %v921 = vpop.f32.mrf.mxu0
  %922 = vdwg.mxu0
  %v923 = vmul.f32 %v920, 0.5
  %v924 = vtanh.pop %v923
  %v925 = vmul.f32 %v178, %v924
  %v926 = vadd.f32 %v925, %v182
  %v927 = vmul.f32 %v926, %v841
  %929 = vrot.lane.b32.xlu0 %v926, 64
  %v930 = vpop.permute.xlu0 %929
  %v932 = vmul.f32 %v926, %v930
  %934 = vrot.lane.b32.xlu0 %v932, 32
  %v935 = vpop.permute.xlu0 %934
  %v937 = vadd.f32 %v927, %v935
  %v938 = vtanh.pop %v937
  %940 = vrot.lane.b32.xlu0 %v938, 64
  %v941 = vpop.permute.xlu0 %940
  %v943 = vmul.f32 %v926, %v941
  %945 = vrot.lane.b32.xlu0 %v943, 32
  %v946 = vpop.permute.xlu0 %945
  %s948 = scalar_lea.vmem [#allocation3], 56
  %949 = vst.msk [vmem:[%s948] sm:$0xff] %vm157, %v946
  %v950 = vld [vmem:[#allocation3] sm:$0xff]
  %v951 = vld [vmem:[#allocation3 + $0x8] sm:$0xff]
  %v952 = vld [vmem:[#allocation3 + $0x10] sm:$0xff]
  %v953 = vld [vmem:[#allocation3 + $0x18] sm:$0xff]
  %v954 = vld [vmem:[#allocation3 + $0x20] sm:$0xff]
  %v955 = vld [vmem:[#allocation3 + $0x28] sm:$0xff]
  %v956 = vld [vmem:[#allocation3 + $0x30] sm:$0xff]
  %v957 = vld [vmem:[#allocation3 + $0x38] sm:$0xff]
  %v958 = vld [vmem:[%s6] sm:$0xff]
  %v959 = vld [vmem:[%s6 + $0x8] sm:$0xff]
  %v960 = vld [vmem:[%s6 + $0x10] sm:$0xff]
  %v961 = vld [vmem:[%s6 + $0x18] sm:$0xff]
  %v962 = vld [vmem:[%s7] sm:$0x1]
  %v964 = vperm.slane %v962, 0
  %v967 = vsel %vm157, %v950, 0
  %v970 = vsel %vm157, %v951, 0
  %v973 = vsel %vm157, %v952, 0
  %v976 = vsel %vm157, %v953, 0
  %v979 = vsel %vm157, %v954, 0
  %v982 = vsel %vm157, %v955, 0
  %v985 = vsel %vm157, %v956, 0
  %v988 = vsel %vm157, %v957, 0
  %990 = vmatpush.msra.mxu0 0.0
  %991 = vmatpush.msra.mxu0 0.0
  %992 = vmatpush.msra.mxu0 0.0
  %993 = vmatpush.msra.mxu0 0.0
  %994 = vmatpush.msra.mxu0 0.0
  %995 = vmatpush.msra.mxu0 0.0
  %996 = vmatpush.msra.mxu0 0.0
  %997 = vmatpush.msra.mxu0 0.0
  %998 = vmatpush.msra.mxu0 0.0
  %999 = vmatpush.msra.mxu0 0.0
  %1000 = vmatpush.msra.mxu0 0.0
  %1001 = vmatpush.msra.mxu0 0.0
  %1002 = vmatpush.msra.mxu0 %v961
  %1003 = vmatpush.msra.mxu0 %v960
  %1004 = vmatpush.msra.mxu0 %v959
  %1005 = vmatpush.msra.mxu0 %v958
  %1006 = vmatmul.f32.gmra.mxu0 %v967
  %v1007 = vpop.f32.mrf.mxu0
  %v1008 = vadd.f32 %v964, %v1007
  %1009 = vmatmul.f32.gmra.mxu0 %v970
  %v1010 = vpop.f32.mrf.mxu0
  %v1011 = vadd.f32 %v964, %v1010
  %1012 = vmatmul.f32.gmra.mxu0 %v973
  %v1013 = vpop.f32.mrf.mxu0
  %v1014 = vadd.f32 %v964, %v1013
  %1015 = vmatmul.f32.gmra.mxu0 %v976
  %v1016 = vpop.f32.mrf.mxu0
  %v1017 = vadd.f32 %v964, %v1016
  %1018 = vmatmul.f32.gmra.mxu0 %v979
  %v1019 = vpop.f32.mrf.mxu0
  %v1020 = vadd.f32 %v964, %v1019
  %1021 = vmatmul.f32.gmra.mxu0 %v982
  %v1022 = vpop.f32.mrf.mxu0
  %v1023 = vadd.f32 %v964, %v1022
  %1024 = vmatmul.f32.gmra.mxu0 %v985
  %v1025 = vpop.f32.mrf.mxu0
  %v1026 = vadd.f32 %v964, %v1025
  %1027 = vmatmul.f32.gmra.mxu0 %v988
  %v1028 = vpop.f32.mrf.mxu0
  %v1029 = vadd.f32 %v964, %v1028
  %1030 = vdwg.mxu0
  %v1031 = vmax.f32 %v1008, 0.0
  %v1032 = vmax.f32 %v1011, 0.0
  %v1033 = vmax.f32 %v1014, 0.0
  %v1034 = vmax.f32 %v1017, 0.0
  %v1035 = vmax.f32 %v1020, 0.0
  %v1036 = vmax.f32 %v1023, 0.0
  %v1037 = vmax.f32 %v1026, 0.0
  %v1038 = vmax.f32 %v1029, 0.0
  %v1039 = vld [vmem:[%s8] sm:$0xff]
  %v1040 = vld [vmem:[%s8 + $0x8] sm:$0xff]
  %v1041 = vld [vmem:[%s9] sm:$0x1]
  %v1043 = vperm.slane %v1041, 0
  %vm1045 = vcmask 130048
  %v1047 = vsel %vm1045, %v1031, 0
  %v1050 = vsel %vm1045, %v1032, 0
  %v1053 = vsel %vm1045, %v1033, 0
  %v1056 = vsel %vm1045, %v1034, 0
  %v1059 = vsel %vm1045, %v1035, 0
  %v1062 = vsel %vm1045, %v1036, 0
  %v1065 = vsel %vm1045, %v1037, 0
  %v1068 = vsel %vm1045, %v1038, 0
  %1070 = vmatpush.msra.mxu0 0.0
  %1071 = vmatpush.msra.mxu0 0.0
  %1072 = vmatpush.msra.mxu0 0.0
  %1073 = vmatpush.msra.mxu0 0.0
  %1074 = vmatpush.msra.mxu0 0.0
  %1075 = vmatpush.msra.mxu0 0.0
  %1076 = vmatpush.msra.mxu0 0.0
  %1077 = vmatpush.msra.mxu0 0.0
  %1078 = vmatpush.msra.mxu0 0.0
  %1079 = vmatpush.msra.mxu0 0.0
  %1080 = vmatpush.msra.mxu0 0.0
  %1081 = vmatpush.msra.mxu0 0.0
  %1082 = vmatpush.msra.mxu0 0.0
  %1083 = vmatpush.msra.mxu0 0.0
  %1084 = vmatpush.msra.mxu0 %v1040
  %1085 = vmatpush.msra.mxu0 %v1039
  %1086 = vmatmul.f32.gmra.mxu0 %v1047
  %v1087 = vpop.f32.mrf.mxu0
  %v1088 = vadd.f32 %v1043, %v1087
  %1089 = vmatmul.f32.gmra.mxu0 %v1050
  %v1090 = vpop.f32.mrf.mxu0
  %v1091 = vadd.f32 %v1043, %v1090
  %1092 = vmatmul.f32.gmra.mxu0 %v1053
  %v1093 = vpop.f32.mrf.mxu0
  %v1094 = vadd.f32 %v1043, %v1093
  %1095 = vmatmul.f32.gmra.mxu0 %v1056
  %v1096 = vpop.f32.mrf.mxu0
  %v1097 = vadd.f32 %v1043, %v1096
  %1098 = vmatmul.f32.gmra.mxu0 %v1059
  %v1099 = vpop.f32.mrf.mxu0
  %v1100 = vadd.f32 %v1043, %v1099
  %1101 = vmatmul.f32.gmra.mxu0 %v1062
  %v1102 = vpop.f32.mrf.mxu0
  %v1103 = vadd.f32 %v1043, %v1102
  %1104 = vmatmul.f32.gmra.mxu0 %v1065
  %v1105 = vpop.f32.mrf.mxu0
  %v1106 = vadd.f32 %v1043, %v1105
  %1107 = vmatmul.f32.gmra.mxu0 %v1068
  %v1108 = vpop.f32.mrf.mxu0
  %v1109 = vadd.f32 %v1043, %v1108
  %1110 = vdwg.mxu0
  %1111 = vst.msk [vmem:[%s12] sm:$0xff] %vm70, %v1088
  %1112 = vst.msk [vmem:[%s12 + $0x8] sm:$0xff] %vm70, %v1091
  %1113 = vst.msk [vmem:[%s12 + $0x10] sm:$0xff] %vm70, %v1094
  %1114 = vst.msk [vmem:[%s12 + $0x18] sm:$0xff] %vm70, %v1097
  %1115 = vst.msk [vmem:[%s12 + $0x20] sm:$0xff] %vm70, %v1100
  %1116 = vst.msk [vmem:[%s12 + $0x28] sm:$0xff] %vm70, %v1103
  %1117 = vst.msk [vmem:[%s12 + $0x30] sm:$0xff] %vm70, %v1106
  %1118 = vst.msk [vmem:[%s12 + $0x38] sm:$0xff] %vm70, %v1109
  // Predicated region
  $region50: #{tpu_custom_call.1} parent=0 // pred_check
    _
  $region51: #{tpu_custom_call.1} parent=0 // pred_check_branch
    %1120 = sbr.rel (0) target = $region53
  $region52: #{tpu_custom_call.1} parent=0 // pred_region
    _
  $region53: #{tpu_custom_call.1} parent=0 // pred_fallthru
    _
  // Predicated region
  $region54: #{tpu_custom_call.1} parent=0 // pred_check
    _
  $region55: #{tpu_custom_call.1} parent=0 // pred_check_branch
    %1122 = sbr.rel (0) target = $region57
  $region56: #{tpu_custom_call.1} parent=0 // pred_region
    _
  $region57: #{tpu_custom_call.1} parent=0 // pred_fallthru
    _

</llo_original>
